<compile_context>
chip_gen: v7x
topology: tpu7x:2x2x1
jax: 0.10.0
libtpu: 0.0.40
codegen_flags: <defaults>
</compile_context>

<pallas_src>
import functools

import jax
import jax.numpy as jnp
from jax import lax
from jax.experimental import pallas as pl
from jax.experimental.pallas import tpu as pltpu

EPS = 1e-5                      # torch.nn.BatchNorm2d default
TP_MAX = 1024                   # max pixel rows per grid step
Y_CACHE_BUDGET = 8 * 1024 * 1024  # bytes of VMEM we allow for the y cache


def _round_up(a, b):
    return (a + b - 1) // b * b


# ----------------------------------------------------------------------------
# Fused kernel: 1x1 conv + BatchNorm(batch stats) + ReLU + global avg pool +
#               head (1x1 conv) + softmax.
# grid = (phase, image, pixel-tile); leftmost axis slowest, so each phase
# finishes over the whole batch before the next starts.
#   cached path   : phase 0 conv+sum(+cache y), phase 1 centered var (VMEM),
#                   phase 2 normalize+pool+head (VMEM).
#   recompute path: phase 0 conv+sum+sumsq, phase 1 normalize+pool+head.
# ----------------------------------------------------------------------------
def _fused_kernel(x_ref, w1_ref, g_ref, b_ref, w2_ref, b2_ref, out_ref,
                  sum_ref, ssq_ref, mean_ref, scale_ref, shift_ref, acc_ref,
                  *cache_refs,
                  use_cache, HW, T, TP, inv_m, inv_hw, n_images, padded):
    ph = pl.program_id(0)            # phase
    n = pl.program_id(1)             # image index
    t = pl.program_id(2)             # pixel-tile index within the image
    pool_ph = 2 if use_cache else 1  # last phase (normalize + pool + head)
    last_n = n_images - 1
    last_t = T - 1
    y_cache = cache_refs[0] if use_cache else None

    # Row-validity mask: only needed when T*TP over-covers H*W.
    if padded:
        row = lax.broadcasted_iota(jnp.int32, (TP, 1), 0) + t * TP
        valid = row < HW
    else:
        valid = None

    def conv_y():
        # 1x1 conv == channel matmul on the MXU.  f32 tile is cast to bf16
        # in-kernel (no standalone wrapper cast pass).  Conv bias omitted:
        # train-mode BN cancels it exactly.
        xt = x_ref[0].astype(jnp.bfloat16)                      # (TP, Cin)
        y = jnp.dot(xt, w1_ref[...], preferred_element_type=jnp.float32)
        if padded:
            y = jnp.where(valid, y, 0.0)                        # zero padded rows
        return y

    # ---- phase 0: conv + per-channel sums (and cache y) ---------------------
    @pl.when(jnp.logical_and(ph == 0, jnp.logical_and(n == 0, t == 0)))
    def _init_stats():
        sum_ref[...] = jnp.zeros_like(sum_ref)
        ssq_ref[...] = jnp.zeros_like(ssq_ref)

    @pl.when(ph == 0)
    def _stats():
        y = conv_y()
        sum_ref[...] += jnp.sum(y, axis=0, keepdims=True)
        if use_cache:
            y_cache[n * T + t] = y                               # resident in VMEM
        else:
            ssq_ref[...] += jnp.sum(y * y, axis=0, keepdims=True)

    # ---- phase 1 (cached path only): exact centered variance ----------------
    if use_cache:
        @pl.when(jnp.logical_and(ph == 1, jnp.logical_and(n == 0, t == 0)))
        def _mean():
            mean_ref[...] = sum_ref[...] * inv_m
            ssq_ref[...] = jnp.zeros_like(ssq_ref)

        @pl.when(ph == 1)
        def _var():
            y = y_cache[n * T + t]
            d = y - mean_ref[...]
            if padded:
                d = jnp.where(valid, d, 0.0)
            ssq_ref[...] += jnp.sum(d * d, axis=0, keepdims=True)

    # ---- last phase: normalize + ReLU + per-image avg pool + head -----------
    @pl.when(jnp.logical_and(ph == pool_ph, jnp.logical_and(n == 0, t == 0)))
    def _scale_shift():                     # hoisted: computed once per call
        if use_cache:
            mean = mean_ref[...]
            var = ssq_ref[...] * inv_m                      # centered (exact)
        else:
            mean = sum_ref[...] * inv_m
            var = jnp.maximum(ssq_ref[...] * inv_m - mean * mean, 0.0)
        scale_ref[...] = g_ref[...] * lax.rsqrt(var + EPS)
        shift_ref[...] = b_ref[...] - mean * scale_ref[...]

    @pl.when(jnp.logical_and(ph == pool_ph, t == 0))
    def _reset_acc():
        acc_ref[...] = jnp.zeros_like(acc_ref)

    @pl.when(ph == pool_ph)
    def _normalize_pool():
        y = y_cache[n * T + t] if use_cache else conv_y()
        z = jnp.maximum(y * scale_ref[...] + shift_ref[...], 0.0)
        if padded:
            z = jnp.where(valid, z, 0.0)
        acc_ref[...] += jnp.sum(z, axis=0, keepdims=True)

    @pl.when(jnp.logical_and(ph == pool_ph, t == last_t))
    def _head_row():
        # Fused head for image n: pooled (1,32) @ w2 (32,C) + b2, row softmax.
        pooled = acc_ref[...] * inv_hw                          # (1, Cmid)
        logits = jnp.dot(pooled, w2_ref[...],
                         preferred_element_type=jnp.float32) + b2_ref[...]
        m = jnp.max(logits, axis=1, keepdims=True)
        e = jnp.exp(logits - m)
        s = jnp.sum(e, axis=1, keepdims=True)
        out_ref[n] = e * pl.reciprocal(s, approx=True)          # (1, Classes) row


# ----------------------------------------------------------------------------
# Wrapper / forward
# ----------------------------------------------------------------------------
def cnn_classifier_forward(params, x, *, force_no_cache=False):
    """x: (N, H, W, 64) NHWC float32 -> (N, Classes) softmax probabilities."""
    N, H, W, Cin = x.shape
    HW = H * W
    Cmid = params['w1'].shape[1]
    Classes = params['w2'].shape[1]

    # Pixel-tile selection: whole image per step when small; 1024-row tiles
    # with last-tile masking otherwise (no unbounded TP=HW fallback).
    if HW <= TP_MAX:
        TP = _round_up(HW, 8)
        T = 1
    else:
        TP = TP_MAX
        T = -(-HW // TP)
    padded = (T * TP != HW)

    cache_bytes = N * T * TP * Cmid * 4
    use_cache = (not force_no_cache) and cache_bytes <= Y_CACHE_BUDGET
    n_phases = 3 if use_cache else 2

    x3 = x.reshape(N, HW, Cin)                 # f32; bf16 cast happens in-kernel
    w1 = params['w1'].astype(jnp.bfloat16)     # tiny (64x32) weight
    gamma = params['gamma'].reshape(1, Cmid)
    beta = params['beta'].reshape(1, Cmid)
    w2 = params['w2']
    b2 = params['b2'].reshape(1, Classes)

    kernel = functools.partial(
        _fused_kernel,
        use_cache=use_cache, HW=HW, T=T, TP=TP,
        inv_m=1.0 / (N * HW), inv_hw=1.0 / HW,
        n_images=N, padded=padded)

    if use_cache:
        # Phases >= 1 read y from the VMEM cache; collapsing the x block index
        # to a constant lets Pallas skip re-DMAing x in those phases.
        x_map = lambda ph, n, t: (jnp.where(ph == 0, n, 0),
                                  jnp.where(ph == 0, t, 0), 0)
    else:
        x_map = lambda ph, n, t: (n, t, 0)

    scratch_shapes = [
        pltpu.VMEM((1, Cmid), jnp.float32),    # per-channel sum
        pltpu.VMEM((1, Cmid), jnp.float32),    # per-channel (centered) sum-sq
        pltpu.VMEM((1, Cmid), jnp.float32),    # mean (cached path)
        pltpu.VMEM((1, Cmid), jnp.float32),    # BN scale  (hoisted)
        pltpu.VMEM((1, Cmid), jnp.float32),    # BN shift  (hoisted)
        pltpu.VMEM((1, Cmid), jnp.float32),    # per-image pooled accumulator
    ]
    if use_cache:
        scratch_shapes.append(pltpu.VMEM((N * T, TP, Cmid), jnp.float32))

    out = pl.pallas_call(
        kernel,
        out_shape=jax.ShapeDtypeStruct((N, 1, Classes), jnp.float32),
        grid_spec=pltpu.PrefetchScalarGridSpec(
            num_scalar_prefetch=0,
            # BN statistics couple the whole batch -> every axis sequential.
            grid=(n_phases, N, T),
            in_specs=[
                pl.BlockSpec((1, TP, Cin), x_map),
                pl.BlockSpec((Cin, Cmid), lambda ph, n, t: (0, 0)),
                pl.BlockSpec((1, Cmid), lambda ph, n, t: (0, 0)),
                pl.BlockSpec((1, Cmid), lambda ph, n, t: (0, 0)),
                pl.BlockSpec((Cmid, Classes), lambda ph, n, t: (0, 0)),
                pl.BlockSpec((1, Classes), lambda ph, n, t: (0, 0)),
            ],
            # Output stays resident in VMEM for the whole grid; single writeback.
            out_specs=pl.BlockSpec((N, 1, Classes), lambda ph, n, t: (0, 0, 0)),
            scratch_shapes=scratch_shapes,
        ),
        compiler_params=pltpu.CompilerParams(
            dimension_semantics=("arbitrary", "arbitrary", "arbitrary"),
            vmem_limit_bytes=32 * 1024 * 1024),
    )(x3, w1, gamma, beta, w2, b2)
    return out.reshape(N, Classes)


# ----------------------------------------------------------------------------
# Parameters (mirrors the PyTorch module's learnable tensors)
# ----------------------------------------------------------------------------
def init_params(key, cin, classes):
    k1, k2, k3, k4, k5, k6 = jax.random.split(key, 6)
    return dict(
        w1=0.1 * jax.random.normal(k1, (cin, 32), jnp.float32),       # Conv2d(64,32,1)
        b1=0.1 * jax.random.normal(k2, (32,), jnp.float32),           # cancels under BN
        gamma=1.0 + 0.1 * jax.random.normal(k3, (32,), jnp.float32),  # BN weight
        beta=0.1 * jax.random.normal(k4, (32,), jnp.float32),         # BN bias
        w2=0.1 * jax.random.normal(k5, (32, classes), jnp.float32),   # Conv2d(32,C,1)
        b2=0.1 * jax.random.normal(k6, (classes,), jnp.float32),
    )


# ----------------------------------------------------------------------------
# Pure-JAX reference (same semantics, includes the conv1 bias) for checking
# ----------------------------------------------------------------------------
def ref_forward(params, x):
    y = jnp.einsum('nhwc,cd->nhwd', x, params['w1']) + params['b1']
    mean = jnp.mean(y, axis=(0, 1, 2), keepdims=True)
    var = jnp.mean((y - mean) ** 2, axis=(0, 1, 2), keepdims=True)
    y = jnp.maximum((y - mean) / jnp.sqrt(var + EPS) * params['gamma']
                    + params['beta'], 0.0)
    pooled = jnp.mean(y, axis=(1, 2))                    # AdaptiveAvgPool2d(1)
    logits = pooled @ params['w2'] + params['b2']
    return jax.nn.softmax(logits, axis=1)


if __name__ == "__main__":
    N, H, W, Cin, Classes = 2, 16, 16, 64, 16

    key = jax.random.PRNGKey(0)
    kx, kp = jax.random.split(key)
    # NHWC input (PyTorch reference would be NCHW: (N, 64, H, W)).
    x = jax.random.normal(kx, (N, H, W, Cin), jnp.float32)
    params = init_params(kp, Cin, Classes)

    fwd = jax.jit(cnn_classifier_forward, static_argnames=("force_no_cache",))
    ref = ref_forward(params, x)

    # Exercise both the VMEM-cached (default, small inputs) and the recompute
    # fallback (large-input) paths against the f32 reference.
    for tag, force in (("vmem-cached", False), ("recompute", True)):
        out = jax.block_until_ready(fwd(params, x, force_no_cache=force))
        assert out.shape == (N, Classes), (tag, out.shape)
        err = float(jnp.max(jnp.abs(out - ref)))
        if err > 5e-3:  # bf16 MXU operands + approx reciprocal in softmax
            raise RuntimeError(f"[{tag}] Pallas output mismatch vs reference: {err}")
        rowsum_err = float(jnp.max(jnp.abs(jnp.sum(out, axis=1) - 1.0)))
        if rowsum_err > 5e-3:
            raise RuntimeError(f"[{tag}] softmax rows do not sum to 1: {rowsum_err}")

    print("KERNEL_OK")
</pallas_src>

<mosaic_0001>
module attributes {stable_mosaic.version = 11 : i64} {
  func.func @_fused_kernel(%arg0: i32, %arg1: i32, %arg2: i32, %arg3: memref<1x256x64xf32, #tpu.memory_space<vmem>>, %arg4: memref<64x32xbf16, #tpu.memory_space<vmem>>, %arg5: memref<1x32xf32, #tpu.memory_space<vmem>>, %arg6: memref<1x32xf32, #tpu.memory_space<vmem>>, %arg7: memref<32x16xf32, #tpu.memory_space<vmem>>, %arg8: memref<1x16xf32, #tpu.memory_space<vmem>>, %arg9: memref<2x1x16xf32, #tpu.memory_space<vmem>>, %arg10: memref<1x32xf32, #tpu.memory_space<vmem>>, %arg11: memref<1x32xf32, #tpu.memory_space<vmem>>, %arg12: memref<1x32xf32, #tpu.memory_space<vmem>>, %arg13: memref<1x32xf32, #tpu.memory_space<vmem>>, %arg14: memref<1x32xf32, #tpu.memory_space<vmem>>, %arg15: memref<1x32xf32, #tpu.memory_space<vmem>>, %arg16: memref<2x256x32xf32, #tpu.memory_space<vmem>>) attributes {dimension_semantics = [#tpu.dimension_semantics<arbitrary>, #tpu.dimension_semantics<arbitrary>, #tpu.dimension_semantics<arbitrary>], iteration_bounds = array<i64: 3, 2, 1>, scalar_prefetch = 0 : i64, scratch_operands = 7 : i64, tpu.core_type = #tpu.core_type<tc>, window_params = [{transform_indices = @transform_0, window_bounds = array<i64: 1, 256, 64>}, {pipeline_mode = #tpu.pipeline_mode<synchronous>, transform_indices = @transform_1, window_bounds = array<i64: 64, 32>}, {pipeline_mode = #tpu.pipeline_mode<synchronous>, transform_indices = @transform_2, window_bounds = array<i64: 1, 32>}, {pipeline_mode = #tpu.pipeline_mode<synchronous>, transform_indices = @transform_3, window_bounds = array<i64: 1, 32>}, {pipeline_mode = #tpu.pipeline_mode<synchronous>, transform_indices = @transform_4, window_bounds = array<i64: 32, 16>}, {pipeline_mode = #tpu.pipeline_mode<synchronous>, transform_indices = @transform_5, window_bounds = array<i64: 1, 16>}, {pipeline_mode = #tpu.pipeline_mode<synchronous>, transform_indices = @transform_6, window_bounds = array<i64: 2, 1, 16>}]} {
    %c0_i32 = arith.constant 0 : i32
    %0 = arith.cmpi eq, %arg0, %c0_i32 : i32
    %c0_i32_0 = arith.constant 0 : i32
    %1 = arith.cmpi eq, %arg1, %c0_i32_0 : i32
    %c0_i32_1 = arith.constant 0 : i32
    %2 = arith.cmpi eq, %arg2, %c0_i32_1 : i32
    %3 = arith.andi %1, %2 : i1
    %4 = arith.andi %0, %3 : i1
    %5 = arith.extui %4 : i1 to i32
    %c0_i32_2 = arith.constant 0 : i32
    %6 = arith.cmpi ne, %5, %c0_i32_2 : i32
    scf.if %6 {
      %cst = arith.constant 0.000000e+00 : f32
      %40 = vector.broadcast %cst : f32 to vector<1x32xf32>
      %c0 = arith.constant 0 : index
      %c0_21 = arith.constant 0 : index
      %41 = vector.load %arg10[%c0, %c0_21] : memref<1x32xf32, #tpu.memory_space<vmem>>, vector<1x32xf32>
      tpu.vector_store %arg10[%c0, %c0_21], %40 {strides = array<i32>} : memref<1x32xf32, #tpu.memory_space<vmem>>, vector<1x32xf32>,
      %cst_22 = arith.constant 0.000000e+00 : f32
      %42 = vector.broadcast %cst_22 : f32 to vector<1x32xf32>
      %c0_23 = arith.constant 0 : index
      %c0_24 = arith.constant 0 : index
      %43 = vector.load %arg11[%c0_23, %c0_24] : memref<1x32xf32, #tpu.memory_space<vmem>>, vector<1x32xf32>
      tpu.vector_store %arg11[%c0_23, %c0_24], %42 {strides = array<i32>} : memref<1x32xf32, #tpu.memory_space<vmem>>, vector<1x32xf32>,
    } else {
    }
    %c0_i32_3 = arith.constant 0 : i32
    %7 = arith.cmpi eq, %arg0, %c0_i32_3 : i32
    %8 = arith.extui %7 : i1 to i32
    %c0_i32_4 = arith.constant 0 : i32
    %9 = arith.cmpi ne, %8, %c0_i32_4 : i32
    scf.if %9 {
      %c0 = arith.constant 0 : index
      %c0_21 = arith.constant 0 : index
      %c0_22 = arith.constant 0 : index
      %40 = vector.load %arg3[%c0, %c0_21, %c0_22] : memref<1x256x64xf32, #tpu.memory_space<vmem>>, vector<1x256x64xf32>
      %41 = vector.shape_cast %40 : vector<1x256x64xf32> to vector<256x64xf32>
      %42 = arith.truncf %41 : vector<256x64xf32> to vector<256x64xbf16>
      %c0_23 = arith.constant 0 : index
      %c0_24 = arith.constant 0 : index
      %43 = vector.load %arg4[%c0_23, %c0_24] : memref<64x32xbf16, #tpu.memory_space<vmem>>, vector<64x32xbf16>
      %cst = arith.constant dense<0.000000e+00> : vector<256x32xf32>
      %44 = tpu.matmul %42, %43, %cst {dimension_numbers = #tpu.dot_dimension_numbers<[1], [0], [0], [1], [0, 0, 1, 1], [], []>} : vector<256x64xbf16>, vector<64x32xbf16>, vector<256x32xf32> -> vector<256x32xf32>
      %c0_25 = arith.constant 0 : index
      %c0_26 = arith.constant 0 : index
      %45 = vector.load %arg10[%c0_25, %c0_26] : memref<1x32xf32, #tpu.memory_space<vmem>>, vector<1x32xf32>
      %cst_27 = arith.constant dense<0.000000e+00> : vector<32xf32>
      %46 = vector.multi_reduction <add>, %44, %cst_27 [0] : vector<256x32xf32> to vector<32xf32>
      %47 = vector.shape_cast %46 : vector<32xf32> to vector<1x32xf32>
      %48 = arith.addf %45, %47 : vector<1x32xf32>
      %c0_28 = arith.constant 0 : index
      %c0_29 = arith.constant 0 : index
      %49 = vector.load %arg10[%c0_28, %c0_29] : memref<1x32xf32, #tpu.memory_space<vmem>>, vector<1x32xf32>
      tpu.vector_store %arg10[%c0_28, %c0_29], %48 {strides = array<i32>} : memref<1x32xf32, #tpu.memory_space<vmem>>, vector<1x32xf32>,
      %c1_i32_30 = arith.constant 1 : i32
      %50 = arith.muli %arg1, %c1_i32_30 : i32
      %51 = arith.addi %50, %arg2 : i32
      %52 = arith.index_cast %51 : i32 to index
      %c0_31 = arith.constant 0 : index
      %c0_32 = arith.constant 0 : index
      %53 = vector.load %arg16[%52, %c0_31, %c0_32] : memref<2x256x32xf32, #tpu.memory_space<vmem>>, vector<1x256x32xf32>
      %54 = vector.shape_cast %53 : vector<1x256x32xf32> to vector<256x32xf32>
      %55 = vector.shape_cast %44 : vector<256x32xf32> to vector<1x256x32xf32>
      tpu.vector_store %arg16[%52, %c0_31, %c0_32], %55 {strides = array<i32>} : memref<2x256x32xf32, #tpu.memory_space<vmem>>, vector<1x256x32xf32>,
    } else {
    }
    %c1_i32 = arith.constant 1 : i32
    %10 = arith.cmpi eq, %arg0, %c1_i32 : i32
    %c0_i32_5 = arith.constant 0 : i32
    %11 = arith.cmpi eq, %arg1, %c0_i32_5 : i32
    %c0_i32_6 = arith.constant 0 : i32
    %12 = arith.cmpi eq, %arg2, %c0_i32_6 : i32
    %13 = arith.andi %11, %12 : i1
    %14 = arith.andi %10, %13 : i1
    %15 = arith.extui %14 : i1 to i32
    %c0_i32_7 = arith.constant 0 : i32
    %16 = arith.cmpi ne, %15, %c0_i32_7 : i32
    scf.if %16 {
      %c0 = arith.constant 0 : index
      %c0_21 = arith.constant 0 : index
      %40 = vector.load %arg10[%c0, %c0_21] : memref<1x32xf32, #tpu.memory_space<vmem>>, vector<1x32xf32>
      %cst = arith.constant 0.001953125 : f32
      %41 = vector.broadcast %cst : f32 to vector<1x32xf32>
      %42 = arith.mulf %40, %41 : vector<1x32xf32>
      %c0_22 = arith.constant 0 : index
      %c0_23 = arith.constant 0 : index
      %43 = vector.load %arg12[%c0_22, %c0_23] : memref<1x32xf32, #tpu.memory_space<vmem>>, vector<1x32xf32>
      tpu.vector_store %arg12[%c0_22, %c0_23], %42 {strides = array<i32>} : memref<1x32xf32, #tpu.memory_space<vmem>>, vector<1x32xf32>,
      %cst_24 = arith.constant 0.000000e+00 : f32
      %44 = vector.broadcast %cst_24 : f32 to vector<1x32xf32>
      %c0_25 = arith.constant 0 : index
      %c0_26 = arith.constant 0 : index
      %45 = vector.load %arg11[%c0_25, %c0_26] : memref<1x32xf32, #tpu.memory_space<vmem>>, vector<1x32xf32>
      tpu.vector_store %arg11[%c0_25, %c0_26], %44 {strides = array<i32>} : memref<1x32xf32, #tpu.memory_space<vmem>>, vector<1x32xf32>,
    } else {
    }
    %c1_i32_8 = arith.constant 1 : i32
    %17 = arith.cmpi eq, %arg0, %c1_i32_8 : i32
    %18 = arith.extui %17 : i1 to i32
    %c0_i32_9 = arith.constant 0 : i32
    %19 = arith.cmpi ne, %18, %c0_i32_9 : i32
    scf.if %19 {
      %c1_i32_21 = arith.constant 1 : i32
      %40 = arith.muli %arg1, %c1_i32_21 : i32
      %41 = arith.addi %40, %arg2 : i32
      %42 = arith.index_cast %41 : i32 to index
      %c0 = arith.constant 0 : index
      %c0_22 = arith.constant 0 : index
      %43 = vector.load %arg16[%42, %c0, %c0_22] : memref<2x256x32xf32, #tpu.memory_space<vmem>>, vector<1x256x32xf32>
      %44 = vector.shape_cast %43 : vector<1x256x32xf32> to vector<256x32xf32>
      %c0_23 = arith.constant 0 : index
      %c0_24 = arith.constant 0 : index
      %45 = vector.load %arg12[%c0_23, %c0_24] : memref<1x32xf32, #tpu.memory_space<vmem>>, vector<1x32xf32>
      %46 = vector.broadcast %45 : vector<1x32xf32> to vector<256x32xf32>
      %47 = arith.subf %44, %46 : vector<256x32xf32>
      %c0_25 = arith.constant 0 : index
      %c0_26 = arith.constant 0 : index
      %48 = vector.load %arg11[%c0_25, %c0_26] : memref<1x32xf32, #tpu.memory_space<vmem>>, vector<1x32xf32>
      %49 = arith.mulf %47, %47 : vector<256x32xf32>
      %cst = arith.constant dense<0.000000e+00> : vector<32xf32>
      %50 = vector.multi_reduction <add>, %49, %cst [0] : vector<256x32xf32> to vector<32xf32>
      %51 = vector.shape_cast %50 : vector<32xf32> to vector<1x32xf32>
      %52 = arith.addf %48, %51 : vector<1x32xf32>
      %c0_27 = arith.constant 0 : index
      %c0_28 = arith.constant 0 : index
      %53 = vector.load %arg11[%c0_27, %c0_28] : memref<1x32xf32, #tpu.memory_space<vmem>>, vector<1x32xf32>
      tpu.vector_store %arg11[%c0_27, %c0_28], %52 {strides = array<i32>} : memref<1x32xf32, #tpu.memory_space<vmem>>, vector<1x32xf32>,
    } else {
    }
    %c2_i32 = arith.constant 2 : i32
    %20 = arith.cmpi eq, %arg0, %c2_i32 : i32
    %c0_i32_10 = arith.constant 0 : i32
    %21 = arith.cmpi eq, %arg1, %c0_i32_10 : i32
    %c0_i32_11 = arith.constant 0 : i32
    %22 = arith.cmpi eq, %arg2, %c0_i32_11 : i32
    %23 = arith.andi %21, %22 : i1
    %24 = arith.andi %20, %23 : i1
    %25 = arith.extui %24 : i1 to i32
    %c0_i32_12 = arith.constant 0 : i32
    %26 = arith.cmpi ne, %25, %c0_i32_12 : i32
    scf.if %26 {
      %c0 = arith.constant 0 : index
      %c0_21 = arith.constant 0 : index
      %40 = vector.load %arg12[%c0, %c0_21] : memref<1x32xf32, #tpu.memory_space<vmem>>, vector<1x32xf32>
      %c0_22 = arith.constant 0 : index
      %c0_23 = arith.constant 0 : index
      %41 = vector.load %arg11[%c0_22, %c0_23] : memref<1x32xf32, #tpu.memory_space<vmem>>, vector<1x32xf32>
      %cst = arith.constant 0.001953125 : f32
      %42 = vector.broadcast %cst : f32 to vector<1x32xf32>
      %43 = arith.mulf %41, %42 : vector<1x32xf32>
      %c0_24 = arith.constant 0 : index
      %c0_25 = arith.constant 0 : index
      %44 = vector.load %arg5[%c0_24, %c0_25] : memref<1x32xf32, #tpu.memory_space<vmem>>, vector<1x32xf32>
      %cst_26 = arith.constant 9.99999974E-6 : f32
      %45 = vector.broadcast %cst_26 : f32 to vector<1x32xf32>
      %46 = arith.addf %43, %45 : vector<1x32xf32>
      %47 = math.rsqrt %46 : vector<1x32xf32>
      %48 = arith.mulf %44, %47 : vector<1x32xf32>
      %c0_27 = arith.constant 0 : index
      %c0_28 = arith.constant 0 : index
      %49 = vector.load %arg13[%c0_27, %c0_28] : memref<1x32xf32, #tpu.memory_space<vmem>>, vector<1x32xf32>
      tpu.vector_store %arg13[%c0_27, %c0_28], %48 {strides = array<i32>} : memref<1x32xf32, #tpu.memory_space<vmem>>, vector<1x32xf32>,
      %c0_29 = arith.constant 0 : index
      %c0_30 = arith.constant 0 : index
      %50 = vector.load %arg6[%c0_29, %c0_30] : memref<1x32xf32, #tpu.memory_space<vmem>>, vector<1x32xf32>
      %c0_31 = arith.constant 0 : index
      %c0_32 = arith.constant 0 : index
      %51 = vector.load %arg13[%c0_31, %c0_32] : memref<1x32xf32, #tpu.memory_space<vmem>>, vector<1x32xf32>
      %52 = arith.mulf %40, %51 : vector<1x32xf32>
      %53 = arith.subf %50, %52 : vector<1x32xf32>
      %c0_33 = arith.constant 0 : index
      %c0_34 = arith.constant 0 : index
      %54 = vector.load %arg14[%c0_33, %c0_34] : memref<1x32xf32, #tpu.memory_space<vmem>>, vector<1x32xf32>
      tpu.vector_store %arg14[%c0_33, %c0_34], %53 {strides = array<i32>} : memref<1x32xf32, #tpu.memory_space<vmem>>, vector<1x32xf32>,
    } else {
    }
    %c2_i32_13 = arith.constant 2 : i32
    %27 = arith.cmpi eq, %arg0, %c2_i32_13 : i32
    %c0_i32_14 = arith.constant 0 : i32
    %28 = arith.cmpi eq, %arg2, %c0_i32_14 : i32
    %29 = arith.andi %27, %28 : i1
    %30 = arith.extui %29 : i1 to i32
    %c0_i32_15 = arith.constant 0 : i32
    %31 = arith.cmpi ne, %30, %c0_i32_15 : i32
    scf.if %31 {
      %cst = arith.constant 0.000000e+00 : f32
      %40 = vector.broadcast %cst : f32 to vector<1x32xf32>
      %c0 = arith.constant 0 : index
      %c0_21 = arith.constant 0 : index
      %41 = vector.load %arg15[%c0, %c0_21] : memref<1x32xf32, #tpu.memory_space<vmem>>, vector<1x32xf32>
      tpu.vector_store %arg15[%c0, %c0_21], %40 {strides = array<i32>} : memref<1x32xf32, #tpu.memory_space<vmem>>, vector<1x32xf32>,
    } else {
    }
    %c2_i32_16 = arith.constant 2 : i32
    %32 = arith.cmpi eq, %arg0, %c2_i32_16 : i32
    %33 = arith.extui %32 : i1 to i32
    %c0_i32_17 = arith.constant 0 : i32
    %34 = arith.cmpi ne, %33, %c0_i32_17 : i32
    scf.if %34 {
      %c1_i32_21 = arith.constant 1 : i32
      %40 = arith.muli %arg1, %c1_i32_21 : i32
      %41 = arith.addi %40, %arg2 : i32
      %42 = arith.index_cast %41 : i32 to index
      %c0 = arith.constant 0 : index
      %c0_22 = arith.constant 0 : index
      %43 = vector.load %arg16[%42, %c0, %c0_22] : memref<2x256x32xf32, #tpu.memory_space<vmem>>, vector<1x256x32xf32>
      %44 = vector.shape_cast %43 : vector<1x256x32xf32> to vector<256x32xf32>
      %c0_23 = arith.constant 0 : index
      %c0_24 = arith.constant 0 : index
      %45 = vector.load %arg13[%c0_23, %c0_24] : memref<1x32xf32, #tpu.memory_space<vmem>>, vector<1x32xf32>
      %46 = vector.broadcast %45 : vector<1x32xf32> to vector<256x32xf32>
      %47 = arith.mulf %44, %46 : vector<256x32xf32>
      %c0_25 = arith.constant 0 : index
      %c0_26 = arith.constant 0 : index
      %48 = vector.load %arg14[%c0_25, %c0_26] : memref<1x32xf32, #tpu.memory_space<vmem>>, vector<1x32xf32>
      %49 = vector.broadcast %48 : vector<1x32xf32> to vector<256x32xf32>
      %50 = arith.addf %47, %49 : vector<256x32xf32>
      %cst = arith.constant 0.000000e+00 : f32
      %51 = vector.broadcast %cst : f32 to vector<256x32xf32>
      %52 = arith.maximumf %50, %51 : vector<256x32xf32>
      %c0_27 = arith.constant 0 : index
      %c0_28 = arith.constant 0 : index
      %53 = vector.load %arg15[%c0_27, %c0_28] : memref<1x32xf32, #tpu.memory_space<vmem>>, vector<1x32xf32>
      %cst_29 = arith.constant dense<0.000000e+00> : vector<32xf32>
      %54 = vector.multi_reduction <add>, %52, %cst_29 [0] : vector<256x32xf32> to vector<32xf32>
      %55 = vector.shape_cast %54 : vector<32xf32> to vector<1x32xf32>
      %56 = arith.addf %53, %55 : vector<1x32xf32>
      %c0_30 = arith.constant 0 : index
      %c0_31 = arith.constant 0 : index
      %57 = vector.load %arg15[%c0_30, %c0_31] : memref<1x32xf32, #tpu.memory_space<vmem>>, vector<1x32xf32>
      tpu.vector_store %arg15[%c0_30, %c0_31], %56 {strides = array<i32>} : memref<1x32xf32, #tpu.memory_space<vmem>>, vector<1x32xf32>,
    } else {
    }
    %c2_i32_18 = arith.constant 2 : i32
    %35 = arith.cmpi eq, %arg0, %c2_i32_18 : i32
    %c0_i32_19 = arith.constant 0 : i32
    %36 = arith.cmpi eq, %arg2, %c0_i32_19 : i32
    %37 = arith.andi %35, %36 : i1
    %38 = arith.extui %37 : i1 to i32
    %c0_i32_20 = arith.constant 0 : i32
    %39 = arith.cmpi ne, %38, %c0_i32_20 : i32
    scf.if %39 {
      %c0 = arith.constant 0 : index
      %c0_21 = arith.constant 0 : index
      %40 = vector.load %arg15[%c0, %c0_21] : memref<1x32xf32, #tpu.memory_space<vmem>>, vector<1x32xf32>
      %cst = arith.constant 3.906250e-03 : f32
      %41 = vector.broadcast %cst : f32 to vector<1x32xf32>
      %42 = arith.mulf %40, %41 : vector<1x32xf32>
      %c0_22 = arith.constant 0 : index
      %c0_23 = arith.constant 0 : index
      %43 = vector.load %arg7[%c0_22, %c0_23] : memref<32x16xf32, #tpu.memory_space<vmem>>, vector<32x16xf32>
      %cst_24 = arith.constant dense<0.000000e+00> : vector<1x16xf32>
      %44 = tpu.matmul %42, %43, %cst_24 {dimension_numbers = #tpu.dot_dimension_numbers<[1], [0], [0], [1], [0, 0, 1, 1], [], []>} : vector<1x32xf32>, vector<32x16xf32>, vector<1x16xf32> -> vector<1x16xf32>
      %c0_25 = arith.constant 0 : index
      %c0_26 = arith.constant 0 : index
      %45 = vector.load %arg8[%c0_25, %c0_26] : memref<1x16xf32, #tpu.memory_space<vmem>>, vector<1x16xf32>
      %46 = arith.addf %44, %45 : vector<1x16xf32>
      %cst_27 = arith.constant dense<0xFF800000> : vector<1xf32>
      %47 = vector.multi_reduction <maximumf>, %46, %cst_27 [1] : vector<1x16xf32> to vector<1xf32>
      %48 = vector.shape_cast %47 : vector<1xf32> to vector<1x1xf32>
      %49 = vector.broadcast %48 : vector<1x1xf32> to vector<1x16xf32>
      %50 = arith.subf %46, %49 : vector<1x16xf32>
      %51 = math.exp %50 : vector<1x16xf32>
      %cst_28 = arith.constant dense<0.000000e+00> : vector<1xf32>
      %52 = vector.multi_reduction <add>, %51, %cst_28 [1] : vector<1x16xf32> to vector<1xf32>
      %53 = vector.shape_cast %52 : vector<1xf32> to vector<1x1xf32>
      %54 = tpu.reciprocal %53 {approx = true} : vector<1x1xf32> -> vector<1x1xf32>
      %55 = vector.broadcast %54 : vector<1x1xf32> to vector<1x16xf32>
      %56 = arith.mulf %51, %55 : vector<1x16xf32>
      %57 = arith.index_cast %arg1 : i32 to index
      %c0_29 = arith.constant 0 : index
      %c0_30 = arith.constant 0 : index
      %58 = vector.load %arg9[%57, %c0_29, %c0_30] : memref<2x1x16xf32, #tpu.memory_space<vmem>>, vector<1x1x16xf32>
      %59 = vector.shape_cast %58 : vector<1x1x16xf32> to vector<1x16xf32>
      %60 = vector.shape_cast %56 : vector<1x16xf32> to vector<1x1x16xf32>
      tpu.vector_store %arg9[%57, %c0_29, %c0_30], %60 {strides = array<i32>} : memref<2x1x16xf32, #tpu.memory_space<vmem>>, vector<1x1x16xf32>,
    } else {
    }
    return
  }
  func.func @transform_0(%arg0: i32, %arg1: i32, %arg2: i32) -> (i32, i32, i32) {
    %c0_i32 = arith.constant 0 : i32
    %0 = arith.cmpi eq, %arg0, %c0_i32 : i32
    %c0_i32_0 = arith.constant 0 : i32
    %1 = arith.select %0, %arg1, %c0_i32_0 : i32
    %c0_i32_1 = arith.constant 0 : i32
    %2 = arith.cmpi eq, %arg0, %c0_i32_1 : i32
    %c0_i32_2 = arith.constant 0 : i32
    %3 = arith.select %2, %arg2, %c0_i32_2 : i32
    %c0_i32_3 = arith.constant 0 : i32
    %c0_i32_4 = arith.constant 0 : i32
    return %1, %3, %c0_i32_3 : i32, i32, i32
  }
  func.func @transform_1(%arg0: i32, %arg1: i32, %arg2: i32) -> (i32, i32) {
    %c0_i32 = arith.constant 0 : i32
    %c0_i32_0 = arith.constant 0 : i32
    %c0_i32_1 = arith.constant 0 : i32
    return %c0_i32, %c0_i32_0 : i32, i32
  }
  func.func @transform_2(%arg0: i32, %arg1: i32, %arg2: i32) -> (i32, i32) {
    %c0_i32 = arith.constant 0 : i32
    %c0_i32_0 = arith.constant 0 : i32
    %c0_i32_1 = arith.constant 0 : i32
    return %c0_i32, %c0_i32_0 : i32, i32
  }
  func.func @transform_3(%arg0: i32, %arg1: i32, %arg2: i32) -> (i32, i32) {
    %c0_i32 = arith.constant 0 : i32
    %c0_i32_0 = arith.constant 0 : i32
    %c0_i32_1 = arith.constant 0 : i32
    return %c0_i32, %c0_i32_0 : i32, i32
  }
  func.func @transform_4(%arg0: i32, %arg1: i32, %arg2: i32) -> (i32, i32) {
    %c0_i32 = arith.constant 0 : i32
    %c0_i32_0 = arith.constant 0 : i32
    %c0_i32_1 = arith.constant 0 : i32
    return %c0_i32, %c0_i32_0 : i32, i32
  }
  func.func @transform_5(%arg0: i32, %arg1: i32, %arg2: i32) -> (i32, i32) {
    %c0_i32 = arith.constant 0 : i32
    %c0_i32_0 = arith.constant 0 : i32
    %c0_i32_1 = arith.constant 0 : i32
    return %c0_i32, %c0_i32_0 : i32, i32
  }
  func.func @transform_6(%arg0: i32, %arg1: i32, %arg2: i32) -> (i32, i32, i32) {
    %c0_i32 = arith.constant 0 : i32
    %c0_i32_0 = arith.constant 0 : i32
    %c0_i32_1 = arith.constant 0 : i32
    %c0_i32_2 = arith.constant 0 : i32
    return %c0_i32, %c0_i32_0, %c0_i32_1 : i32, i32, i32
  }
}

</mosaic_0001>

<llo_original>
// kernel: cnn_classifier_forward.1
$region0: #{cnn_classifier_forward.1}
  #allocation0 [shape = 'u32[]', space=smem, size = 0x4, offset = 0x4, fixed_abs, tag = 'smem constant byte address 0x4 - core index']
  #allocation1 [shape = 'u32[144,128]{1,0:T(1,128)}', space=vmem, size = 0x12000, scoped, tag = 'internal scratch']
  #allocation2 [shape = 'f32[1,32]{1,0:T(1,128)}', space=vmem, size = 0x200, scoped, tag = 'scratch operand']
  #allocation3 [shape = 'f32[1,32]{1,0:T(1,128)}', space=vmem, size = 0x200, scoped, tag = 'scratch operand']
  #allocation4 [shape = 'f32[1,32]{1,0:T(1,128)}', space=vmem, size = 0x200, scoped, tag = 'scratch operand']
  #allocation5 [shape = 'f32[1,32]{1,0:T(1,128)}', space=vmem, size = 0x200, scoped, tag = 'scratch operand']
  #allocation6 [shape = 'f32[1,32]{1,0:T(1,128)}', space=vmem, size = 0x200, scoped, tag = 'scratch operand']
  #allocation7 [shape = 'f32[1,32]{1,0:T(1,128)}', space=vmem, size = 0x200, scoped, tag = 'scratch operand']
  #allocation8 [shape = 'f32[2,256,32]{2,1,0:T(8,128)}', space=vmem, size = 0x40000, scoped, tag = 'scratch operand']
  %s0 = inlined_call_operand.hbm [shape: f32[2,256,64], index: 0, kind: input, shape index: {}]
  %s1 = inlined_call_operand.vmem [shape: bf16[64,32], index: 1, kind: input, shape index: {}]
  %s2 = inlined_call_operand.vmem [shape: f32[1,32], index: 2, kind: input, shape index: {}]
  %s3 = inlined_call_operand.vmem [shape: f32[1,32], index: 3, kind: input, shape index: {}]
  %s4 = inlined_call_operand.vmem [shape: f32[32,16], index: 4, kind: input, shape index: {}]
  %s5 = inlined_call_operand.vmem [shape: f32[1,16], index: 5, kind: input, shape index: {}]
  %s6 = inlined_call_operand.hbm [shape: f32[2,1,16], index: 6, kind: output, shape index: {}]
  %s7 = sld [smem:[#allocation0]]
  $region93: #{cnn_classifier_forward.1} parent=0
    _
  %s9 = ssub.s32 1, %s7
  %s10 = scalar_select 0, %s9, %s7
  $region1: #{cnn_classifier_forward.1} parent=0
    #allocation9 [shape = 'u8[262144]{0}', space=vmem, size = 0x40000, scoped, tag = 'input window, operand 0']
    #allocation10 [shape = 's32[2]{0}', space=sflag, size = 0x8, scoped, tag = 'scoped memory for cnn_classifier_forward.1']
    #allocation11 [shape = 's32[2]{0}', space=sflag, size = 0x8, scoped, tag = 'scoped memory for cnn_classifier_forward.1']
    #allocation12 [shape = 'u8[1024]{0}', space=vmem, size = 0x400, scoped, tag = 'output window, operand 0, single buffered']
    %11 = vsyncpa [#allocation10], 0
    %s12 = scalar_lea.sflag [#allocation10], 1
    %13 = vsyncpa %s12, 0
    %14 = vsyncpa [#allocation11], 0
    loop: start=0, step=1, limit=8
    $region2: #{cnn_classifier_forward.1} parent=1 // loop_pre_header
      _
    $region3: #{cnn_classifier_forward.1} parent=1 // loop_header
      %s16 = sphi 0, %s20
      %p17 = scmp.ge.s32.totalorder %s16, 8
      %s23 = sphi 0, %s42
      %s24 = sphi 0, %s38
      %s25 = sphi 0, %s34
      %s26 = sphi 0, %s23
      %s27 = sphi 0, %s24
      %s28 = sphi 0, %s25
      %s29 = sphi 0, %s26
      %s30 = sphi 0, %s27
      %s31 = sphi 0, %s28
      %s53 = sphi 0, %s55
      %s56 = sphi 0, %s53
      %s57 = sphi 0, %s56
      %s73 = sphi 0, %s57
      %s77 = sphi 0, %s77
      %s79 = sphi 0, %s77
      %s80 = sphi 0, %s79
      %s94 = sphi 0, %s80
      %s98 = sphi 0, %s98
      %s100 = sphi 0, %s98
      %s101 = sphi 0, %s100
      %s115 = sphi 0, %s101
      %s119 = sphi 0, %s119
      %s121 = sphi 0, %s119
      %s122 = sphi 0, %s121
      %s136 = sphi 0, %s122
      %s140 = sphi 0, %s140
      %s142 = sphi 0, %s140
      %s143 = sphi 0, %s142
      %s157 = sphi 0, %s143
      %s161 = sphi 0, %s161
      %s163 = sphi 0, %s161
      %s164 = sphi 0, %s163
      %s178 = sphi 0, %s164
      %s182 = sphi 0, %s182
      %s184 = sphi 0, %s182
      %s185 = sphi 0, %s184
      %s199 = sphi 0, %s185
    $region4: #{cnn_classifier_forward.1} parent=1 // loop_header_branch
      %19 = sbr.rel (%p17) target = $region8
    $region5: #{cnn_classifier_forward.1} parent=1 // loop_body
      %s21 = ssub.s32 %s16, 1
      %s22 = ssub.s32 %s16, 2
      %s32 = sadd.s32 1, %s25
      %p33 = scmp.ge.s32.totalorder %s32, 1
      %s34 = scalar_select %p33, 0, %s32
      %s35 = sadd.s32 1, %s24
      %s36 = scalar_select %p33, %s35, %s24
      %p37 = scmp.ge.s32.totalorder %s36, 2
      %s38 = scalar_select %p37, 0, %s36
      %s39 = sadd.s32 1, %s23
      %s40 = scalar_select %p37, %s39, %s23
      %p41 = scmp.ge.s32.totalorder %s40, 3
      %s42 = scalar_select %p41, 0, %s40
      %p43 = scmp.eq.s32.totalorder %s23, 0
      %s44 = scalar_select %p43, %s24, 0
      %s45 = scalar_select %p43, %s25, 0
      %p46 = scmp.eq.s32.totalorder %s42, 0
      %s47 = scalar_select %p46, %s38, 0
      %s48 = scalar_select %p46, %s34, 0
      %s49 = ssub.s32 %s44, %s47
      %s50 = ssub.s32 %s45, %s48
      %s51 = sor.u32 %s49, %s50
      %p52 = scmp.eq.s32.totalorder %s51, 0
      %s54 = sadd.s32 %s53, 1
      %s55 = scalar_select %p52, %s53, %s54
      %p58 = pneg %p52
      %p59 = scmp.eq.s32.totalorder %s16, 5
      %p60 = por %p58, %p59
      %p61 = scmp.ne.s32.totalorder %s53, %s56
      %p62 = scmp.eq.s32.totalorder %s16, 0
      %p63 = por %p61, %p62
      %p64 = scmp.ne.s32.totalorder %s53, %s56
      %p65 = scmp.eq.s32.totalorder %s21, 5
      %p66 = por %p64, %p65
      %p67 = scmp.ne.s32.totalorder %s56, %s57
      %p68 = scmp.eq.s32.totalorder %s21, 0
      %p69 = por %p67, %p68
      %p70 = scmp.ne.s32.totalorder %s56, %s57
      %p71 = scmp.eq.s32.totalorder %s22, 5
      %p72 = por %p70, %p71
      %p74 = scmp.ne.s32.totalorder %s57, %s73
      %p75 = scmp.eq.s32.totalorder %s22, 0
      %p76 = por %p74, %p75
      %s78 = sadd.s32 %s77, 1
      %p81 = scmp.eq.s32.totalorder %s16, 5
      %p82 = scmp.ne.s32.totalorder %s77, %s79
      %p83 = scmp.eq.s32.totalorder %s16, 0
      %p84 = por %p82, %p83
      %p85 = scmp.ne.s32.totalorder %s77, %s79
      %p86 = scmp.eq.s32.totalorder %s21, 5
      %p87 = por %p85, %p86
      %p88 = scmp.ne.s32.totalorder %s79, %s80
      %p89 = scmp.eq.s32.totalorder %s21, 0
      %p90 = por %p88, %p89
      %p91 = scmp.ne.s32.totalorder %s79, %s80
      %p92 = scmp.eq.s32.totalorder %s22, 5
      %p93 = por %p91, %p92
      %p95 = scmp.ne.s32.totalorder %s80, %s94
      %p96 = scmp.eq.s32.totalorder %s22, 0
      %p97 = por %p95, %p96
      %s99 = sadd.s32 %s98, 1
      %p102 = scmp.eq.s32.totalorder %s16, 5
      %p103 = scmp.ne.s32.totalorder %s98, %s100
      %p104 = scmp.eq.s32.totalorder %s16, 0
      %p105 = por %p103, %p104
      %p106 = scmp.ne.s32.totalorder %s98, %s100
      %p107 = scmp.eq.s32.totalorder %s21, 5
      %p108 = por %p106, %p107
      %p109 = scmp.ne.s32.totalorder %s100, %s101
      %p110 = scmp.eq.s32.totalorder %s21, 0
      %p111 = por %p109, %p110
      %p112 = scmp.ne.s32.totalorder %s100, %s101
      %p113 = scmp.eq.s32.totalorder %s22, 5
      %p114 = por %p112, %p113
      %p116 = scmp.ne.s32.totalorder %s101, %s115
      %p117 = scmp.eq.s32.totalorder %s22, 0
      %p118 = por %p116, %p117
      %s120 = sadd.s32 %s119, 1
      %p123 = scmp.eq.s32.totalorder %s16, 5
      %p124 = scmp.ne.s32.totalorder %s119, %s121
      %p125 = scmp.eq.s32.totalorder %s16, 0
      %p126 = por %p124, %p125
      %p127 = scmp.ne.s32.totalorder %s119, %s121
      %p128 = scmp.eq.s32.totalorder %s21, 5
      %p129 = por %p127, %p128
      %p130 = scmp.ne.s32.totalorder %s121, %s122
      %p131 = scmp.eq.s32.totalorder %s21, 0
      %p132 = por %p130, %p131
      %p133 = scmp.ne.s32.totalorder %s121, %s122
      %p134 = scmp.eq.s32.totalorder %s22, 5
      %p135 = por %p133, %p134
      %p137 = scmp.ne.s32.totalorder %s122, %s136
      %p138 = scmp.eq.s32.totalorder %s22, 0
      %p139 = por %p137, %p138
      %s141 = sadd.s32 %s140, 1
      %p144 = scmp.eq.s32.totalorder %s16, 5
      %p145 = scmp.ne.s32.totalorder %s140, %s142
      %p146 = scmp.eq.s32.totalorder %s16, 0
      %p147 = por %p145, %p146
      %p148 = scmp.ne.s32.totalorder %s140, %s142
      %p149 = scmp.eq.s32.totalorder %s21, 5
      %p150 = por %p148, %p149
      %p151 = scmp.ne.s32.totalorder %s142, %s143
      %p152 = scmp.eq.s32.totalorder %s21, 0
      %p153 = por %p151, %p152
      %p154 = scmp.ne.s32.totalorder %s142, %s143
      %p155 = scmp.eq.s32.totalorder %s22, 5
      %p156 = por %p154, %p155
      %p158 = scmp.ne.s32.totalorder %s143, %s157
      %p159 = scmp.eq.s32.totalorder %s22, 0
      %p160 = por %p158, %p159
      %s162 = sadd.s32 %s161, 1
      %p165 = scmp.eq.s32.totalorder %s16, 5
      %p166 = scmp.ne.s32.totalorder %s161, %s163
      %p167 = scmp.eq.s32.totalorder %s16, 0
      %p168 = por %p166, %p167
      %p169 = scmp.ne.s32.totalorder %s161, %s163
      %p170 = scmp.eq.s32.totalorder %s21, 5
      %p171 = por %p169, %p170
      %p172 = scmp.ne.s32.totalorder %s163, %s164
      %p173 = scmp.eq.s32.totalorder %s21, 0
      %p174 = por %p172, %p173
      %p175 = scmp.ne.s32.totalorder %s163, %s164
      %p176 = scmp.eq.s32.totalorder %s22, 5
      %p177 = por %p175, %p176
      %p179 = scmp.ne.s32.totalorder %s164, %s178
      %p180 = scmp.eq.s32.totalorder %s22, 0
      %p181 = por %p179, %p180
      %s183 = sadd.s32 %s182, 1
      %p186 = scmp.eq.s32.totalorder %s16, 5
      %p187 = scmp.ne.s32.totalorder %s182, %s184
      %p188 = scmp.eq.s32.totalorder %s16, 0
      %p189 = por %p187, %p188
      %p190 = scmp.ne.s32.totalorder %s182, %s184
      %p191 = scmp.eq.s32.totalorder %s21, 5
      %p192 = por %p190, %p191
      %p193 = scmp.ne.s32.totalorder %s184, %s185
      %p194 = scmp.eq.s32.totalorder %s21, 0
      %p195 = por %p193, %p194
      %p196 = scmp.ne.s32.totalorder %s184, %s185
      %p197 = scmp.eq.s32.totalorder %s22, 5
      %p198 = por %p196, %p197
      %p200 = scmp.ne.s32.totalorder %s185, %s199
      %p201 = scmp.eq.s32.totalorder %s22, 0
      %p202 = por %p200, %p201
      %p203 = scmp.le.s32.totalorder 1, %s16
      %p204 = scmp.lt.s32.totalorder %s16, 7
      %p205 = pnand %p203, %p204
      %p206 = pneg %p205
      // Predicated region
      $region9: #{cnn_classifier_forward.1} parent=5 // pred_check
        _
      $region10: #{cnn_classifier_forward.1} parent=5 // pred_check_branch
        %208 = sbr.rel (%p205) target = $region12
      $region11: #{cnn_classifier_forward.1} parent=5 // pred_region
        %s209 = ssub.s32 %s16, 1
        // Predicated region
        $region13: #{cnn_classifier_forward.1} parent=11 // pred_check
          %p210 = pneg %p90
        $region14: #{cnn_classifier_forward.1} parent=11 // pred_check_branch
          %212 = sbr.rel (%p210) target = $region16
        $region15: #{cnn_classifier_forward.1} parent=11 // pred_region
          _
        $region16: #{cnn_classifier_forward.1} parent=11 // pred_fallthru
          _
        // Predicated region
        $region17: #{cnn_classifier_forward.1} parent=11 // pred_check
          %p213 = pneg %p111
        $region18: #{cnn_classifier_forward.1} parent=11 // pred_check_branch
          %215 = sbr.rel (%p213) target = $region20
        $region19: #{cnn_classifier_forward.1} parent=11 // pred_region
          _
        $region20: #{cnn_classifier_forward.1} parent=11 // pred_fallthru
          _
        // Predicated region
        $region21: #{cnn_classifier_forward.1} parent=11 // pred_check
          %p216 = pneg %p132
        $region22: #{cnn_classifier_forward.1} parent=11 // pred_check_branch
          %218 = sbr.rel (%p216) target = $region24
        $region23: #{cnn_classifier_forward.1} parent=11 // pred_region
          _
        $region24: #{cnn_classifier_forward.1} parent=11 // pred_fallthru
          _
        // Predicated region
        $region25: #{cnn_classifier_forward.1} parent=11 // pred_check
          %p219 = pneg %p153
        $region26: #{cnn_classifier_forward.1} parent=11 // pred_check_branch
          %221 = sbr.rel (%p219) target = $region28
        $region27: #{cnn_classifier_forward.1} parent=11 // pred_region
          _
        $region28: #{cnn_classifier_forward.1} parent=11 // pred_fallthru
          _
        // Predicated region
        $region29: #{cnn_classifier_forward.1} parent=11 // pred_check
          %p222 = pneg %p174
        $region30: #{cnn_classifier_forward.1} parent=11 // pred_check_branch
          %224 = sbr.rel (%p222) target = $region32
        $region31: #{cnn_classifier_forward.1} parent=11 // pred_region
          _
        $region32: #{cnn_classifier_forward.1} parent=11 // pred_fallthru
          _
      $region12: #{cnn_classifier_forward.1} parent=5 // pred_fallthru
        _
      %p225 = scmp.lt.s32.totalorder %s16, 6
      // Predicated region
      $region33: #{cnn_classifier_forward.1} parent=5 // pred_check
        %p226 = pneg %p225
      $region34: #{cnn_classifier_forward.1} parent=5 // pred_check_branch
        %228 = sbr.rel (%p226) target = $region36
      $region35: #{cnn_classifier_forward.1} parent=5 // pred_region
        // Predicated region
        $region37: #{cnn_classifier_forward.1} parent=35 // pred_check
          %p229 = pneg %p63
        $region38: #{cnn_classifier_forward.1} parent=35 // pred_check_branch
          %231 = sbr.rel (%p229) target = $region40
        $region39: #{cnn_classifier_forward.1} parent=35 // pred_region
          %s232 = sand.u32 %s53, 1
          %s233 = scalar_lea.sflag [#allocation10], %s232
          %s234 = sand.u32 %s53, 1
          %s235 = smul.addr %s234, 256
          %s236 = scalar_lea.vmem [#allocation9], %s235
          %p237 = scmp.eq.s32.totalorder %s23, 0
          %s238 = scalar_select %p237, %s24, 0
          %s239 = scalar_select %p237, %s25, 0
          %s240 = smul.u32 32, %s239
          %s242 = ssub.s32 4096, 4096
          %243 = vsyncadd %s233, %s242
          %s244 = smul.addr %s238, 32
          %s245 = sadd.s32 %s240, %s244
          %s246 = smul.addr %s245, 128
          %s247 = scalar_lea.hbm %s0, %s246
          %s248 = sshll.u32 %s236, 4
          %s249 = int_to_ptr.vmem [resolvable:$true] %s248
          %254 = dma.hbm_to_vmem [thread:$0]  %s247, 4096, %s249, %s233, 128, 128, 8
        $region40: #{cnn_classifier_forward.1} parent=35 // pred_fallthru
          _
      $region36: #{cnn_classifier_forward.1} parent=5 // pred_fallthru
        _
      %p255 = scmp.le.s32.totalorder 1, %s16
      %p256 = scmp.lt.s32.totalorder %s16, 7
      %p257 = pnand %p255, %p256
      %p258 = pneg %p257
      // Predicated region
      $region41: #{cnn_classifier_forward.1} parent=5 // pred_check
        _
      $region42: #{cnn_classifier_forward.1} parent=5 // pred_check_branch
        %260 = sbr.rel (%p257) target = $region44
      $region43: #{cnn_classifier_forward.1} parent=5 // pred_region
        %s261 = ssub.s32 %s16, 1
        %s262 = sand.u32 %s56, 1
        %s263 = scalar_lea.sflag [#allocation10], %s262
        %s264 = sand.u32 %s56, 1
        %s265 = smul.addr %s264, 256
        %s266 = scalar_lea.vmem [#allocation9], %s265
        // Predicated region
        $region45: #{cnn_classifier_forward.1} parent=43 // pred_check
          %p267 = pneg %p69
        $region46: #{cnn_classifier_forward.1} parent=43 // pred_check_branch
          %269 = sbr.rel (%p267) target = $region48
        $region47: #{cnn_classifier_forward.1} parent=43 // pred_region
          %270 = dma.done %s263, 4096
        $region48: #{cnn_classifier_forward.1} parent=43 // pred_fallthru
          _
        %s271 = sand.u32 %s56, 1
        %s272 = scalar_lea.sflag [#allocation10], %s271
        %s273 = sand.u32 %s56, 1
        %s274 = smul.addr %s273, 256
        %s275 = scalar_lea.vmem [#allocation9], %s274
        %p276 = pneg %p69
        %p277 = pneg %p66
        %p278 = pneg %p90
        %p279 = pneg %p87
        %p280 = pneg %p111
        %p281 = pneg %p108
        %p282 = pneg %p132
        %p283 = pneg %p129
        %p284 = pneg %p153
        %p285 = pneg %p150
        %p286 = pneg %p174
        %p287 = pneg %p171
        %p288 = pneg %p195
        %p289 = pneg %p192
        %p290 = scmp.eq.s32.totalorder %s26, 0
        %s291 = scalar_select %p290, %s27, 0
        %s292 = scalar_select %p290, %s28, 0
        %s293 = smul.u32 32, %s292
        %p295 = scmp.eq.s32.totalorder %s26, 0
        %p296 = scmp.eq.s32.totalorder %s27, 0
        %p297 = scmp.eq.s32.totalorder %s28, 0
        %p298 = pnand %p296, %p297
        %p299 = pneg %p298
        %p300 = pnand %p295, %p299
        %p301 = pneg %p300
        // Predicated region
        $region49: #{cnn_classifier_forward.1} parent=43 // pred_check
          _
        $region50: #{cnn_classifier_forward.1} parent=43 // pred_check_branch
          %303 = sbr.rel (%p300) target = $region52
        $region51: #{cnn_classifier_forward.1} parent=43 // pred_region
          %vm304 = vcmask 253952
          %305 = vst.msk [vmem:[#allocation2] sm:$0x1] %vm304, 0.0
          %306 = vst.msk [vmem:[#allocation3] sm:$0x1] %vm304, 0.0
        $region52: #{cnn_classifier_forward.1} parent=43 // pred_fallthru
          _
        // Predicated region
        $region53: #{cnn_classifier_forward.1} parent=43 // pred_check
          %p307 = pneg %p295
        $region54: #{cnn_classifier_forward.1} parent=43 // pred_check_branch
          %309 = sbr.rel (%p307) target = $region56
        $region55: #{cnn_classifier_forward.1} parent=43 // pred_region
          %v310 = vld [vmem:[%s266] sm:$0xff]
          %v311 = vld [vmem:[%s266 + $0x8] sm:$0xff]
          %v312 = vld [vmem:[%s266 + $0x10] sm:$0xff]
          %v313 = vld [vmem:[%s266 + $0x18] sm:$0xff]
          %v314 = vld [vmem:[%s266 + $0x20] sm:$0xff]
          %v315 = vld [vmem:[%s266 + $0x28] sm:$0xff]
          %v316 = vld [vmem:[%s266 + $0x30] sm:$0xff]
          %v317 = vld [vmem:[%s266 + $0x38] sm:$0xff]
          %v318 = vld [vmem:[%s266 + $0x40] sm:$0xff]
          %v319 = vld [vmem:[%s266 + $0x48] sm:$0xff]
          %v320 = vld [vmem:[%s266 + $0x50] sm:$0xff]
          %v321 = vld [vmem:[%s266 + $0x58] sm:$0xff]
          %v322 = vld [vmem:[%s266 + $0x60] sm:$0xff]
          %v323 = vld [vmem:[%s266 + $0x68] sm:$0xff]
          %v324 = vld [vmem:[%s266 + $0x70] sm:$0xff]
          %v325 = vld [vmem:[%s266 + $0x78] sm:$0xff]
          %v326 = vld [vmem:[%s266 + $0x80] sm:$0xff]
          %v327 = vld [vmem:[%s266 + $0x88] sm:$0xff]
          %v328 = vld [vmem:[%s266 + $0x90] sm:$0xff]
          %v329 = vld [vmem:[%s266 + $0x98] sm:$0xff]
          %v330 = vld [vmem:[%s266 + $0xa0] sm:$0xff]
          %v331 = vld [vmem:[%s266 + $0xa8] sm:$0xff]
          %v332 = vld [vmem:[%s266 + $0xb0] sm:$0xff]
          %v333 = vld [vmem:[%s266 + $0xb8] sm:$0xff]
          %v334 = vld [vmem:[%s266 + $0xc0] sm:$0xff]
          %v335 = vld [vmem:[%s266 + $0xc8] sm:$0xff]
          %v336 = vld [vmem:[%s266 + $0xd0] sm:$0xff]
          %v337 = vld [vmem:[%s266 + $0xd8] sm:$0xff]
          %v338 = vld [vmem:[%s266 + $0xe0] sm:$0xff]
          %v339 = vld [vmem:[%s266 + $0xe8] sm:$0xff]
          %v340 = vld [vmem:[%s266 + $0xf0] sm:$0xff]
          %v341 = vld [vmem:[%s266 + $0xf8] sm:$0xff]
          %v342 = vpack.c.bf16 %v311, %v310
          %v343 = vpack.c.bf16 %v313, %v312
          %v344 = vpack.c.bf16 %v315, %v314
          %v345 = vpack.c.bf16 %v317, %v316
          %v346 = vpack.c.bf16 %v319, %v318
          %v347 = vpack.c.bf16 %v321, %v320
          %v348 = vpack.c.bf16 %v323, %v322
          %v349 = vpack.c.bf16 %v325, %v324
          %v350 = vpack.c.bf16 %v327, %v326
          %v351 = vpack.c.bf16 %v329, %v328
          %v352 = vpack.c.bf16 %v331, %v330
          %v353 = vpack.c.bf16 %v333, %v332
          %v354 = vpack.c.bf16 %v335, %v334
          %v355 = vpack.c.bf16 %v337, %v336
          %v356 = vpack.c.bf16 %v339, %v338
          %v357 = vpack.c.bf16 %v341, %v340
          %v358 = vld [vmem:[%s1] sm:$0xf]
          %v359 = vld [vmem:[%s1 + $0x4] sm:$0xf]
          %v360 = vld [vmem:[%s1 + $0x8] sm:$0xf]
          %v361 = vld [vmem:[%s1 + $0xc] sm:$0xf]
          %v362 = vld [vmem:[%s1 + $0x10] sm:$0xf]
          %v363 = vld [vmem:[%s1 + $0x14] sm:$0xf]
          %v364 = vld [vmem:[%s1 + $0x18] sm:$0xf]
          %v365 = vld [vmem:[%s1 + $0x1c] sm:$0xf]
          %v374 = vunpack.c.l.b16 %v358
          %v375 = vunpack.c.l.b16 %v359
          %v376 = vunpack.c.l.b16 %v360
          %v377 = vunpack.c.l.b16 %v361
          %v378 = vunpack.c.l.b16 %v362
          %v379 = vunpack.c.l.b16 %v363
          %v380 = vunpack.c.l.b16 %v364
          %v381 = vunpack.c.l.b16 %v365
          %v382 = vpack.c.b16 %v375, %v374
          %v383 = vpack.c.b16 %v377, %v376
          %v384 = vpack.c.b16 %v379, %v378
          %v385 = vpack.c.b16 %v381, %v380
          %vm390 = vcmask 523264
          %v392 = vsel %vm390, %v342, 0
          %v395 = vsel %vm390, %v343, 0
          %v398 = vsel %vm390, %v344, 0
          %v401 = vsel %vm390, %v345, 0
          %v404 = vsel %vm390, %v346, 0
          %v407 = vsel %vm390, %v347, 0
          %v410 = vsel %vm390, %v348, 0
          %v413 = vsel %vm390, %v349, 0
          %v416 = vsel %vm390, %v350, 0
          %v419 = vsel %vm390, %v351, 0
          %v422 = vsel %vm390, %v352, 0
          %v425 = vsel %vm390, %v353, 0
          %v428 = vsel %vm390, %v354, 0
          %v431 = vsel %vm390, %v355, 0
          %v434 = vsel %vm390, %v356, 0
          %v437 = vsel %vm390, %v357, 0
          %439 = vmatprep.subr.bf16.mxu0 0
          %440 = vmatpush1.bf16.msra.mxu0 %v382
          %441 = vmatprep.subr.bf16.mxu0 0
          %442 = vmatpush1.bf16.msra.mxu0 %v383
          %443 = vmatprep.subr.bf16.mxu0 0
          %444 = vmatpush1.bf16.msra.mxu0 %v384
          %445 = vmatprep.subr.bf16.mxu0 0
          %446 = vmatpush1.bf16.msra.mxu0 %v385
          %447 = vmatprep.subr.bf16.mxu0 0
          %448 = vmatpush1.bf16.msra.mxu0 0
          %449 = vmatprep.subr.bf16.mxu0 0
          %450 = vmatpush1.bf16.msra.mxu0 0
          %451 = vmatprep.subr.bf16.mxu0 0
          %452 = vmatpush1.bf16.msra.mxu0 0
          %453 = vmatprep.subr.bf16.mxu0 0
          %454 = vmatpush1.bf16.msra.mxu0 0
          %455 = vmatprep.subr.bf16.mxu0 0
          %456 = vmatpush1.bf16.msra.mxu0 0
          %457 = vmatprep.subr.bf16.mxu0 0
          %458 = vmatpush1.bf16.msra.mxu0 0
          %459 = vmatprep.subr.bf16.mxu0 0
          %460 = vmatpush1.bf16.msra.mxu0 0
          %461 = vmatprep.subr.bf16.mxu0 0
          %462 = vmatpush1.bf16.msra.mxu0 0
          %463 = vmatprep.subr.bf16.mxu0 0
          %464 = vmatpush1.bf16.msra.mxu0 0
          %465 = vmatprep.subr.bf16.mxu0 0
          %466 = vmatpush1.bf16.msra.mxu0 0
          %467 = vmatprep.subr.bf16.mxu0 0
          %468 = vmatpush1.bf16.msra.mxu0 0
          %469 = vmatprep.subr.bf16.mxu0 0
          %470 = vmatpush1.bf16.msra.mxu0 0
          %471 = vmatprep.mubr.bf16.mxu0 0
          %472 = vmatmul.mubr.bf16.gmra.mrb[0].mxu0 %v392
          %v473 = vpop.f32.mrb[0].mxu0
          %v474 = vadd.f32 0.0, %v473
          %v475 = vpop.f32.mrb[0].mxu0
          %v476 = vpop.f32.mrb[0].mxu0
          %v477 = vadd.f32 0.0, %v476
          %v478 = vpop.f32.mrb[0].mxu0
          %479 = vmatprep.mubr.bf16.mxu0 0
          %480 = vmatmul.mubr.bf16.gmra.mrb[0].mxu0 %v395
          %v481 = vpop.f32.mrb[0].mxu0
          %v482 = vadd.f32 0.0, %v481
          %v483 = vpop.f32.mrb[0].mxu0
          %v484 = vpop.f32.mrb[0].mxu0
          %v485 = vadd.f32 0.0, %v484
          %v486 = vpop.f32.mrb[0].mxu0
          %487 = vmatprep.mubr.bf16.mxu0 0
          %488 = vmatmul.mubr.bf16.gmra.mrb[0].mxu0 %v398
          %v489 = vpop.f32.mrb[0].mxu0
          %v490 = vadd.f32 0.0, %v489
          %v491 = vpop.f32.mrb[0].mxu0
          %v492 = vpop.f32.mrb[0].mxu0
          %v493 = vadd.f32 0.0, %v492
          %v494 = vpop.f32.mrb[0].mxu0
          %495 = vmatprep.mubr.bf16.mxu0 0
          %496 = vmatmul.mubr.bf16.gmra.mrb[0].mxu0 %v401
          %v497 = vpop.f32.mrb[0].mxu0
          %v498 = vadd.f32 0.0, %v497
          %v499 = vpop.f32.mrb[0].mxu0
          %v500 = vpop.f32.mrb[0].mxu0
          %v501 = vadd.f32 0.0, %v500
          %v502 = vpop.f32.mrb[0].mxu0
          %503 = vmatprep.mubr.bf16.mxu0 0
          %504 = vmatmul.mubr.bf16.gmra.mrb[0].mxu0 %v404
          %v505 = vpop.f32.mrb[0].mxu0
          %v506 = vadd.f32 0.0, %v505
          %v507 = vpop.f32.mrb[0].mxu0
          %v508 = vpop.f32.mrb[0].mxu0
          %v509 = vadd.f32 0.0, %v508
          %v510 = vpop.f32.mrb[0].mxu0
          %511 = vmatprep.mubr.bf16.mxu0 0
          %512 = vmatmul.mubr.bf16.gmra.mrb[0].mxu0 %v407
          %v513 = vpop.f32.mrb[0].mxu0
          %v514 = vadd.f32 0.0, %v513
          %v515 = vpop.f32.mrb[0].mxu0
          %v516 = vpop.f32.mrb[0].mxu0
          %v517 = vadd.f32 0.0, %v516
          %v518 = vpop.f32.mrb[0].mxu0
          %519 = vmatprep.mubr.bf16.mxu0 0
          %520 = vmatmul.mubr.bf16.gmra.mrb[0].mxu0 %v410
          %v521 = vpop.f32.mrb[0].mxu0
          %v522 = vadd.f32 0.0, %v521
          %v523 = vpop.f32.mrb[0].mxu0
          %v524 = vpop.f32.mrb[0].mxu0
          %v525 = vadd.f32 0.0, %v524
          %v526 = vpop.f32.mrb[0].mxu0
          %527 = vmatprep.mubr.bf16.mxu0 0
          %528 = vmatmul.mubr.bf16.gmra.mrb[0].mxu0 %v413
          %v529 = vpop.f32.mrb[0].mxu0
          %v530 = vadd.f32 0.0, %v529
          %v531 = vpop.f32.mrb[0].mxu0
          %v532 = vpop.f32.mrb[0].mxu0
          %v533 = vadd.f32 0.0, %v532
          %v534 = vpop.f32.mrb[0].mxu0
          %535 = vmatprep.mubr.bf16.mxu0 0
          %536 = vmatmul.mubr.bf16.gmra.mrb[0].mxu0 %v416
          %v537 = vpop.f32.mrb[0].mxu0
          %v538 = vadd.f32 0.0, %v537
          %v539 = vpop.f32.mrb[0].mxu0
          %v540 = vpop.f32.mrb[0].mxu0
          %v541 = vadd.f32 0.0, %v540
          %v542 = vpop.f32.mrb[0].mxu0
          %543 = vmatprep.mubr.bf16.mxu0 0
          %544 = vmatmul.mubr.bf16.gmra.mrb[0].mxu0 %v419
          %v545 = vpop.f32.mrb[0].mxu0
          %v546 = vadd.f32 0.0, %v545
          %v547 = vpop.f32.mrb[0].mxu0
          %v548 = vpop.f32.mrb[0].mxu0
          %v549 = vadd.f32 0.0, %v548
          %v550 = vpop.f32.mrb[0].mxu0
          %551 = vmatprep.mubr.bf16.mxu0 0
          %552 = vmatmul.mubr.bf16.gmra.mrb[0].mxu0 %v422
          %v553 = vpop.f32.mrb[0].mxu0
          %v554 = vadd.f32 0.0, %v553
          %v555 = vpop.f32.mrb[0].mxu0
          %v556 = vpop.f32.mrb[0].mxu0
          %v557 = vadd.f32 0.0, %v556
          %v558 = vpop.f32.mrb[0].mxu0
          %559 = vmatprep.mubr.bf16.mxu0 0
          %560 = vmatmul.mubr.bf16.gmra.mrb[0].mxu0 %v425
          %v561 = vpop.f32.mrb[0].mxu0
          %v562 = vadd.f32 0.0, %v561
          %v563 = vpop.f32.mrb[0].mxu0
          %v564 = vpop.f32.mrb[0].mxu0
          %v565 = vadd.f32 0.0, %v564
          %v566 = vpop.f32.mrb[0].mxu0
          %567 = vmatprep.mubr.bf16.mxu0 0
          %568 = vmatmul.mubr.bf16.gmra.mrb[0].mxu0 %v428
          %v569 = vpop.f32.mrb[0].mxu0
          %v570 = vadd.f32 0.0, %v569
          %v571 = vpop.f32.mrb[0].mxu0
          %v572 = vpop.f32.mrb[0].mxu0
          %v573 = vadd.f32 0.0, %v572
          %v574 = vpop.f32.mrb[0].mxu0
          %575 = vmatprep.mubr.bf16.mxu0 0
          %576 = vmatmul.mubr.bf16.gmra.mrb[0].mxu0 %v431
          %v577 = vpop.f32.mrb[0].mxu0
          %v578 = vadd.f32 0.0, %v577
          %v579 = vpop.f32.mrb[0].mxu0
          %v580 = vpop.f32.mrb[0].mxu0
          %v581 = vadd.f32 0.0, %v580
          %v582 = vpop.f32.mrb[0].mxu0
          %583 = vmatprep.mubr.bf16.mxu0 0
          %584 = vmatmul.mubr.bf16.gmra.mrb[0].mxu0 %v434
          %v585 = vpop.f32.mrb[0].mxu0
          %v586 = vadd.f32 0.0, %v585
          %v587 = vpop.f32.mrb[0].mxu0
          %v588 = vpop.f32.mrb[0].mxu0
          %v589 = vadd.f32 0.0, %v588
          %v590 = vpop.f32.mrb[0].mxu0
          %591 = vmatprep.mubr.bf16.mxu0 0
          %592 = vmatmul.mubr.bf16.gmra.mrb[0].mxu0 %v437
          %v593 = vpop.f32.mrb[0].mxu0
          %v594 = vadd.f32 0.0, %v593
          %v595 = vpop.f32.mrb[0].mxu0
          %v596 = vpop.f32.mrb[0].mxu0
          %v597 = vadd.f32 0.0, %v596
          %v598 = vpop.f32.mrb[0].mxu0
          %599 = vdwg.mxu0
          %v600 = vld [vmem:[#allocation2] sm:$0x1]
          %vm601 = vcmask 261120
          %v602 = vsel %vm601, %v474, 0.0
          %v603 = vsel %vm601, %v477, 0.0
          %v604 = vadd.f32 %v602, %v603
          %v605 = vsel %vm601, %v482, 0.0
          %v606 = vadd.f32 %v604, %v605
          %v607 = vsel %vm601, %v485, 0.0
          %v608 = vadd.f32 %v606, %v607
          %v609 = vsel %vm601, %v490, 0.0
          %v610 = vadd.f32 %v608, %v609
          %v611 = vsel %vm601, %v493, 0.0
          %v612 = vadd.f32 %v610, %v611
          %v613 = vsel %vm601, %v498, 0.0
          %v614 = vadd.f32 %v612, %v613
          %v615 = vsel %vm601, %v501, 0.0
          %v616 = vadd.f32 %v614, %v615
          %v617 = vsel %vm601, %v506, 0.0
          %v618 = vadd.f32 %v616, %v617
          %v619 = vsel %vm601, %v509, 0.0
          %v620 = vadd.f32 %v618, %v619
          %v621 = vsel %vm601, %v514, 0.0
          %v622 = vadd.f32 %v620, %v621
          %v623 = vsel %vm601, %v517, 0.0
          %v624 = vadd.f32 %v622, %v623
          %v625 = vsel %vm601, %v522, 0.0
          %v626 = vadd.f32 %v624, %v625
          %v627 = vsel %vm601, %v525, 0.0
          %v628 = vadd.f32 %v626, %v627
          %v629 = vsel %vm601, %v530, 0.0
          %v630 = vadd.f32 %v628, %v629
          %v631 = vsel %vm601, %v533, 0.0
          %v632 = vadd.f32 %v630, %v631
          %v633 = vsel %vm601, %v538, 0.0
          %v634 = vadd.f32 %v632, %v633
          %v635 = vsel %vm601, %v541, 0.0
          %v636 = vadd.f32 %v634, %v635
          %v637 = vsel %vm601, %v546, 0.0
          %v638 = vadd.f32 %v636, %v637
          %v639 = vsel %vm601, %v549, 0.0
          %v640 = vadd.f32 %v638, %v639
          %v641 = vsel %vm601, %v554, 0.0
          %v642 = vadd.f32 %v640, %v641
          %v643 = vsel %vm601, %v557, 0.0
          %v644 = vadd.f32 %v642, %v643
          %v645 = vsel %vm601, %v562, 0.0
          %v646 = vadd.f32 %v644, %v645
          %v647 = vsel %vm601, %v565, 0.0
          %v648 = vadd.f32 %v646, %v647
          %v649 = vsel %vm601, %v570, 0.0
          %v650 = vadd.f32 %v648, %v649
          %v651 = vsel %vm601, %v573, 0.0
          %v652 = vadd.f32 %v650, %v651
          %v653 = vsel %vm601, %v578, 0.0
          %v654 = vadd.f32 %v652, %v653
          %v655 = vsel %vm601, %v581, 0.0
          %v656 = vadd.f32 %v654, %v655
          %v657 = vsel %vm601, %v586, 0.0
          %v658 = vadd.f32 %v656, %v657
          %v659 = vsel %vm601, %v589, 0.0
          %v660 = vadd.f32 %v658, %v659
          %v661 = vsel %vm601, %v594, 0.0
          %v662 = vadd.f32 %v660, %v661
          %v663 = vsel %vm601, %v597, 0.0
          %v664 = vadd.f32 %v662, %v663
          %v665 = vrot.slane %v664, 4
          %v666 = vadd.f32 %v664, %v665
          %v667 = vrot.slane %v666, 2
          %v668 = vadd.f32 %v666, %v667
          %v669 = vrot.slane %v668, 1
          %v670 = vadd.f32 %v668, %v669
          %v671 = vadd.f32 %v600, %v670
          %vm672 = vcmask 253952
          %673 = vst.msk [vmem:[#allocation2] sm:$0x1] %vm672, %v671
          %s674 = sadd.s32 %s27, %s28
          %s675 = smul.u32 %s674, 256
          %s676 = scalar_lea.vmem [#allocation8], %s675
          %677 = vst.msk [vmem:[%s676] sm:$0xff] %vm601, %v474
          %678 = vst.msk [vmem:[%s676 + $0x8] sm:$0xff] %vm601, %v477
          %679 = vst.msk [vmem:[%s676 + $0x10] sm:$0xff] %vm601, %v482
          %680 = vst.msk [vmem:[%s676 + $0x18] sm:$0xff] %vm601, %v485
          %681 = vst.msk [vmem:[%s676 + $0x20] sm:$0xff] %vm601, %v490
          %682 = vst.msk [vmem:[%s676 + $0x28] sm:$0xff] %vm601, %v493
          %683 = vst.msk [vmem:[%s676 + $0x30] sm:$0xff] %vm601, %v498
          %684 = vst.msk [vmem:[%s676 + $0x38] sm:$0xff] %vm601, %v501
          %685 = vst.msk [vmem:[%s676 + $0x40] sm:$0xff] %vm601, %v506
          %686 = vst.msk [vmem:[%s676 + $0x48] sm:$0xff] %vm601, %v509
          %687 = vst.msk [vmem:[%s676 + $0x50] sm:$0xff] %vm601, %v514
          %688 = vst.msk [vmem:[%s676 + $0x58] sm:$0xff] %vm601, %v517
          %689 = vst.msk [vmem:[%s676 + $0x60] sm:$0xff] %vm601, %v522
          %690 = vst.msk [vmem:[%s676 + $0x68] sm:$0xff] %vm601, %v525
          %691 = vst.msk [vmem:[%s676 + $0x70] sm:$0xff] %vm601, %v530
          %692 = vst.msk [vmem:[%s676 + $0x78] sm:$0xff] %vm601, %v533
          %693 = vst.msk [vmem:[%s676 + $0x80] sm:$0xff] %vm601, %v538
          %694 = vst.msk [vmem:[%s676 + $0x88] sm:$0xff] %vm601, %v541
          %695 = vst.msk [vmem:[%s676 + $0x90] sm:$0xff] %vm601, %v546
          %696 = vst.msk [vmem:[%s676 + $0x98] sm:$0xff] %vm601, %v549
          %697 = vst.msk [vmem:[%s676 + $0xa0] sm:$0xff] %vm601, %v554
          %698 = vst.msk [vmem:[%s676 + $0xa8] sm:$0xff] %vm601, %v557
          %699 = vst.msk [vmem:[%s676 + $0xb0] sm:$0xff] %vm601, %v562
          %700 = vst.msk [vmem:[%s676 + $0xb8] sm:$0xff] %vm601, %v565
          %701 = vst.msk [vmem:[%s676 + $0xc0] sm:$0xff] %vm601, %v570
          %702 = vst.msk [vmem:[%s676 + $0xc8] sm:$0xff] %vm601, %v573
          %703 = vst.msk [vmem:[%s676 + $0xd0] sm:$0xff] %vm601, %v578
          %704 = vst.msk [vmem:[%s676 + $0xd8] sm:$0xff] %vm601, %v581
          %705 = vst.msk [vmem:[%s676 + $0xe0] sm:$0xff] %vm601, %v586
          %706 = vst.msk [vmem:[%s676 + $0xe8] sm:$0xff] %vm601, %v589
          %707 = vst.msk [vmem:[%s676 + $0xf0] sm:$0xff] %vm601, %v594
          %708 = vst.msk [vmem:[%s676 + $0xf8] sm:$0xff] %vm601, %v597
        $region56: #{cnn_classifier_forward.1} parent=43 // pred_fallthru
          _
        %p709 = scmp.eq.s32.totalorder %s26, 1
        %p710 = pnand %p709, %p299
        %p711 = pneg %p710
        // Predicated region
        $region57: #{cnn_classifier_forward.1} parent=43 // pred_check
          _
        $region58: #{cnn_classifier_forward.1} parent=43 // pred_check_branch
          %713 = sbr.rel (%p710) target = $region60
        $region59: #{cnn_classifier_forward.1} parent=43 // pred_region
          %v714 = vld [vmem:[#allocation2] sm:$0x1]
          %v715 = vmul.f32 %v714, 0.001953125
          %vm716 = vcmask 253952
          %717 = vst.msk [vmem:[#allocation4] sm:$0x1] %vm716, %v715
          %718 = vst.msk [vmem:[#allocation3] sm:$0x1] %vm716, 0.0
        $region60: #{cnn_classifier_forward.1} parent=43 // pred_fallthru
          _
        // Predicated region
        $region61: #{cnn_classifier_forward.1} parent=43 // pred_check
          %p719 = pneg %p709
        $region62: #{cnn_classifier_forward.1} parent=43 // pred_check_branch
          %721 = sbr.rel (%p719) target = $region64
        $region63: #{cnn_classifier_forward.1} parent=43 // pred_region
          %s722 = sadd.s32 %s27, %s28
          %s723 = smul.u32 %s722, 256
          %s724 = scalar_lea.vmem [#allocation8], %s723
          %v725 = vld [vmem:[%s724] sm:$0xff]
          %v726 = vld [vmem:[%s724 + $0x8] sm:$0xff]
          %v727 = vld [vmem:[%s724 + $0x10] sm:$0xff]
          %v728 = vld [vmem:[%s724 + $0x18] sm:$0xff]
          %v729 = vld [vmem:[%s724 + $0x20] sm:$0xff]
          %v730 = vld [vmem:[%s724 + $0x28] sm:$0xff]
          %v731 = vld [vmem:[%s724 + $0x30] sm:$0xff]
          %v732 = vld [vmem:[%s724 + $0x38] sm:$0xff]
          %v733 = vld [vmem:[%s724 + $0x40] sm:$0xff]
          %v734 = vld [vmem:[%s724 + $0x48] sm:$0xff]
          %v735 = vld [vmem:[%s724 + $0x50] sm:$0xff]
          %v736 = vld [vmem:[%s724 + $0x58] sm:$0xff]
          %v737 = vld [vmem:[%s724 + $0x60] sm:$0xff]
          %v738 = vld [vmem:[%s724 + $0x68] sm:$0xff]
          %v739 = vld [vmem:[%s724 + $0x70] sm:$0xff]
          %v740 = vld [vmem:[%s724 + $0x78] sm:$0xff]
          %v741 = vld [vmem:[%s724 + $0x80] sm:$0xff]
          %v742 = vld [vmem:[%s724 + $0x88] sm:$0xff]
          %v743 = vld [vmem:[%s724 + $0x90] sm:$0xff]
          %v744 = vld [vmem:[%s724 + $0x98] sm:$0xff]
          %v745 = vld [vmem:[%s724 + $0xa0] sm:$0xff]
          %v746 = vld [vmem:[%s724 + $0xa8] sm:$0xff]
          %v747 = vld [vmem:[%s724 + $0xb0] sm:$0xff]
          %v748 = vld [vmem:[%s724 + $0xb8] sm:$0xff]
          %v749 = vld [vmem:[%s724 + $0xc0] sm:$0xff]
          %v750 = vld [vmem:[%s724 + $0xc8] sm:$0xff]
          %v751 = vld [vmem:[%s724 + $0xd0] sm:$0xff]
          %v752 = vld [vmem:[%s724 + $0xd8] sm:$0xff]
          %v753 = vld [vmem:[%s724 + $0xe0] sm:$0xff]
          %v754 = vld [vmem:[%s724 + $0xe8] sm:$0xff]
          %v755 = vld [vmem:[%s724 + $0xf0] sm:$0xff]
          %v756 = vld [vmem:[%s724 + $0xf8] sm:$0xff]
          %v757 = vld [vmem:[#allocation4] sm:$0x1]
          %v759 = vlaneseq
          %v760 = vshrl.u32 %v759, 7
          %v761 = vsub.s32 0, %v760
          %v762 = vrot.slane %v757, %v761
          %v764 = vsub.f32 %v725, %v762
          %v765 = vsub.f32 %v726, %v762
          %v766 = vsub.f32 %v727, %v762
          %v767 = vsub.f32 %v728, %v762
          %v768 = vsub.f32 %v729, %v762
          %v769 = vsub.f32 %v730, %v762
          %v770 = vsub.f32 %v731, %v762
          %v771 = vsub.f32 %v732, %v762
          %v772 = vsub.f32 %v733, %v762
          %v773 = vsub.f32 %v734, %v762
          %v774 = vsub.f32 %v735, %v762
          %v775 = vsub.f32 %v736, %v762
          %v776 = vsub.f32 %v737, %v762
          %v777 = vsub.f32 %v738, %v762
          %v778 = vsub.f32 %v739, %v762
          %v779 = vsub.f32 %v740, %v762
          %v780 = vsub.f32 %v741, %v762
          %v781 = vsub.f32 %v742, %v762
          %v782 = vsub.f32 %v743, %v762
          %v783 = vsub.f32 %v744, %v762
          %v784 = vsub.f32 %v745, %v762
          %v785 = vsub.f32 %v746, %v762
          %v786 = vsub.f32 %v747, %v762
          %v787 = vsub.f32 %v748, %v762
          %v788 = vsub.f32 %v749, %v762
          %v789 = vsub.f32 %v750, %v762
          %v790 = vsub.f32 %v751, %v762
          %v791 = vsub.f32 %v752, %v762
          %v792 = vsub.f32 %v753, %v762
          %v793 = vsub.f32 %v754, %v762
          %v794 = vsub.f32 %v755, %v762
          %v795 = vsub.f32 %v756, %v762
          %v796 = vld [vmem:[#allocation3] sm:$0x1]
          %v797 = vmul.f32 %v764, %v764
          %v798 = vmul.f32 %v765, %v765
          %v799 = vmul.f32 %v766, %v766
          %v800 = vmul.f32 %v767, %v767
          %v801 = vmul.f32 %v768, %v768
          %v802 = vmul.f32 %v769, %v769
          %v803 = vmul.f32 %v770, %v770
          %v804 = vmul.f32 %v771, %v771
          %v805 = vmul.f32 %v772, %v772
          %v806 = vmul.f32 %v773, %v773
          %v807 = vmul.f32 %v774, %v774
          %v808 = vmul.f32 %v775, %v775
          %v809 = vmul.f32 %v776, %v776
          %v810 = vmul.f32 %v777, %v777
          %v811 = vmul.f32 %v778, %v778
          %v812 = vmul.f32 %v779, %v779
          %v813 = vmul.f32 %v780, %v780
          %v814 = vmul.f32 %v781, %v781
          %v815 = vmul.f32 %v782, %v782
          %v816 = vmul.f32 %v783, %v783
          %v817 = vmul.f32 %v784, %v784
          %v818 = vmul.f32 %v785, %v785
          %v819 = vmul.f32 %v786, %v786
          %v820 = vmul.f32 %v787, %v787
          %v821 = vmul.f32 %v788, %v788
          %v822 = vmul.f32 %v789, %v789
          %v823 = vmul.f32 %v790, %v790
          %v824 = vmul.f32 %v791, %v791
          %v825 = vmul.f32 %v792, %v792
          %v826 = vmul.f32 %v793, %v793
          %v827 = vmul.f32 %v794, %v794
          %v828 = vmul.f32 %v795, %v795
          %vm829 = vcmask 261120
          %v830 = vsel %vm829, %v797, 0.0
          %v831 = vsel %vm829, %v798, 0.0
          %v832 = vadd.f32 %v830, %v831
          %v833 = vsel %vm829, %v799, 0.0
          %v834 = vadd.f32 %v832, %v833
          %v835 = vsel %vm829, %v800, 0.0
          %v836 = vadd.f32 %v834, %v835
          %v837 = vsel %vm829, %v801, 0.0
          %v838 = vadd.f32 %v836, %v837
          %v839 = vsel %vm829, %v802, 0.0
          %v840 = vadd.f32 %v838, %v839
          %v841 = vsel %vm829, %v803, 0.0
          %v842 = vadd.f32 %v840, %v841
          %v843 = vsel %vm829, %v804, 0.0
          %v844 = vadd.f32 %v842, %v843
          %v845 = vsel %vm829, %v805, 0.0
          %v846 = vadd.f32 %v844, %v845
          %v847 = vsel %vm829, %v806, 0.0
          %v848 = vadd.f32 %v846, %v847
          %v849 = vsel %vm829, %v807, 0.0
          %v850 = vadd.f32 %v848, %v849
          %v851 = vsel %vm829, %v808, 0.0
          %v852 = vadd.f32 %v850, %v851
          %v853 = vsel %vm829, %v809, 0.0
          %v854 = vadd.f32 %v852, %v853
          %v855 = vsel %vm829, %v810, 0.0
          %v856 = vadd.f32 %v854, %v855
          %v857 = vsel %vm829, %v811, 0.0
          %v858 = vadd.f32 %v856, %v857
          %v859 = vsel %vm829, %v812, 0.0
          %v860 = vadd.f32 %v858, %v859
          %v861 = vsel %vm829, %v813, 0.0
          %v862 = vadd.f32 %v860, %v861
          %v863 = vsel %vm829, %v814, 0.0
          %v864 = vadd.f32 %v862, %v863
          %v865 = vsel %vm829, %v815, 0.0
          %v866 = vadd.f32 %v864, %v865
          %v867 = vsel %vm829, %v816, 0.0
          %v868 = vadd.f32 %v866, %v867
          %v869 = vsel %vm829, %v817, 0.0
          %v870 = vadd.f32 %v868, %v869
          %v871 = vsel %vm829, %v818, 0.0
          %v872 = vadd.f32 %v870, %v871
          %v873 = vsel %vm829, %v819, 0.0
          %v874 = vadd.f32 %v872, %v873
          %v875 = vsel %vm829, %v820, 0.0
          %v876 = vadd.f32 %v874, %v875
          %v877 = vsel %vm829, %v821, 0.0
          %v878 = vadd.f32 %v876, %v877
          %v879 = vsel %vm829, %v822, 0.0
          %v880 = vadd.f32 %v878, %v879
          %v881 = vsel %vm829, %v823, 0.0
          %v882 = vadd.f32 %v880, %v881
          %v883 = vsel %vm829, %v824, 0.0
          %v884 = vadd.f32 %v882, %v883
          %v885 = vsel %vm829, %v825, 0.0
          %v886 = vadd.f32 %v884, %v885
          %v887 = vsel %vm829, %v826, 0.0
          %v888 = vadd.f32 %v886, %v887
          %v889 = vsel %vm829, %v827, 0.0
          %v890 = vadd.f32 %v888, %v889
          %v891 = vsel %vm829, %v828, 0.0
          %v892 = vadd.f32 %v890, %v891
          %v893 = vrot.slane %v892, 4
          %v894 = vadd.f32 %v892, %v893
          %v895 = vrot.slane %v894, 2
          %v896 = vadd.f32 %v894, %v895
          %v897 = vrot.slane %v896, 1
          %v898 = vadd.f32 %v896, %v897
          %v899 = vadd.f32 %v796, %v898
          %vm900 = vcmask 253952
          %901 = vst.msk [vmem:[#allocation3] sm:$0x1] %vm900, %v899
        $region64: #{cnn_classifier_forward.1} parent=43 // pred_fallthru
          _
        %p902 = scmp.eq.s32.totalorder %s26, 2
        %p903 = pnand %p902, %p299
        %p904 = pneg %p903
        // Predicated region
        $region65: #{cnn_classifier_forward.1} parent=43 // pred_check
          _
        $region66: #{cnn_classifier_forward.1} parent=43 // pred_check_branch
          %906 = sbr.rel (%p903) target = $region68
        $region67: #{cnn_classifier_forward.1} parent=43 // pred_region
          %v907 = vld [vmem:[#allocation4] sm:$0x1]
          %v908 = vld [vmem:[#allocation3] sm:$0x1]
          %v909 = vmul.f32 %v908, 0.001953125
          %v910 = vld [vmem:[%s2] sm:$0x1]
          %v911 = vadd.f32 %v909, 1e-05
          %v912 = vrsqrt.pop %v911
          %v913 = vmul.f32 %v910, %v912
          %vm914 = vcmask 253952
          %915 = vst.msk [vmem:[#allocation5] sm:$0x1] %vm914, %v913
          %v916 = vld [vmem:[%s3] sm:$0x1]
          %v917 = vld [vmem:[#allocation5] sm:$0x1]
          %v918 = vmul.f32 %v907, %v917
          %v919 = vsub.f32 %v916, %v918
          %920 = vst.msk [vmem:[#allocation6] sm:$0x1] %vm914, %v919
        $region68: #{cnn_classifier_forward.1} parent=43 // pred_fallthru
          _
        %p921 = pnand %p902, %p297
        %p922 = pneg %p921
        // Predicated region
        $region69: #{cnn_classifier_forward.1} parent=43 // pred_check
          _
        $region70: #{cnn_classifier_forward.1} parent=43 // pred_check_branch
          %924 = sbr.rel (%p921) target = $region72
        $region71: #{cnn_classifier_forward.1} parent=43 // pred_region
          %vm925 = vcmask 253952
          %926 = vst.msk [vmem:[#allocation7] sm:$0x1] %vm925, 0.0
        $region72: #{cnn_classifier_forward.1} parent=43 // pred_fallthru
          _
        // Predicated region
        $region73: #{cnn_classifier_forward.1} parent=43 // pred_check
          %p927 = pneg %p902
        $region74: #{cnn_classifier_forward.1} parent=43 // pred_check_branch
          %929 = sbr.rel (%p927) target = $region76
        $region75: #{cnn_classifier_forward.1} parent=43 // pred_region
          %s930 = sadd.s32 %s27, %s28
          %s931 = smul.u32 %s930, 256
          %s932 = scalar_lea.vmem [#allocation8], %s931
          %v933 = vld [vmem:[%s932] sm:$0xff]
          %v934 = vld [vmem:[%s932 + $0x8] sm:$0xff]
          %v935 = vld [vmem:[%s932 + $0x10] sm:$0xff]
          %v936 = vld [vmem:[%s932 + $0x18] sm:$0xff]
          %v937 = vld [vmem:[%s932 + $0x20] sm:$0xff]
          %v938 = vld [vmem:[%s932 + $0x28] sm:$0xff]
          %v939 = vld [vmem:[%s932 + $0x30] sm:$0xff]
          %v940 = vld [vmem:[%s932 + $0x38] sm:$0xff]
          %v941 = vld [vmem:[%s932 + $0x40] sm:$0xff]
          %v942 = vld [vmem:[%s932 + $0x48] sm:$0xff]
          %v943 = vld [vmem:[%s932 + $0x50] sm:$0xff]
          %v944 = vld [vmem:[%s932 + $0x58] sm:$0xff]
          %v945 = vld [vmem:[%s932 + $0x60] sm:$0xff]
          %v946 = vld [vmem:[%s932 + $0x68] sm:$0xff]
          %v947 = vld [vmem:[%s932 + $0x70] sm:$0xff]
          %v948 = vld [vmem:[%s932 + $0x78] sm:$0xff]
          %v949 = vld [vmem:[%s932 + $0x80] sm:$0xff]
          %v950 = vld [vmem:[%s932 + $0x88] sm:$0xff]
          %v951 = vld [vmem:[%s932 + $0x90] sm:$0xff]
          %v952 = vld [vmem:[%s932 + $0x98] sm:$0xff]
          %v953 = vld [vmem:[%s932 + $0xa0] sm:$0xff]
          %v954 = vld [vmem:[%s932 + $0xa8] sm:$0xff]
          %v955 = vld [vmem:[%s932 + $0xb0] sm:$0xff]
          %v956 = vld [vmem:[%s932 + $0xb8] sm:$0xff]
          %v957 = vld [vmem:[%s932 + $0xc0] sm:$0xff]
          %v958 = vld [vmem:[%s932 + $0xc8] sm:$0xff]
          %v959 = vld [vmem:[%s932 + $0xd0] sm:$0xff]
          %v960 = vld [vmem:[%s932 + $0xd8] sm:$0xff]
          %v961 = vld [vmem:[%s932 + $0xe0] sm:$0xff]
          %v962 = vld [vmem:[%s932 + $0xe8] sm:$0xff]
          %v963 = vld [vmem:[%s932 + $0xf0] sm:$0xff]
          %v964 = vld [vmem:[%s932 + $0xf8] sm:$0xff]
          %v965 = vld [vmem:[#allocation5] sm:$0x1]
          %v967 = vlaneseq
          %v968 = vshrl.u32 %v967, 7
          %v969 = vsub.s32 0, %v968
          %v970 = vrot.slane %v965, %v969
          %v972 = vmul.f32 %v933, %v970
          %v973 = vmul.f32 %v934, %v970
          %v974 = vmul.f32 %v935, %v970
          %v975 = vmul.f32 %v936, %v970
          %v976 = vmul.f32 %v937, %v970
          %v977 = vmul.f32 %v938, %v970
          %v978 = vmul.f32 %v939, %v970
          %v979 = vmul.f32 %v940, %v970
          %v980 = vmul.f32 %v941, %v970
          %v981 = vmul.f32 %v942, %v970
          %v982 = vmul.f32 %v943, %v970
          %v983 = vmul.f32 %v944, %v970
          %v984 = vmul.f32 %v945, %v970
          %v985 = vmul.f32 %v946, %v970
          %v986 = vmul.f32 %v947, %v970
          %v987 = vmul.f32 %v948, %v970
          %v988 = vmul.f32 %v949, %v970
          %v989 = vmul.f32 %v950, %v970
          %v990 = vmul.f32 %v951, %v970
          %v991 = vmul.f32 %v952, %v970
          %v992 = vmul.f32 %v953, %v970
          %v993 = vmul.f32 %v954, %v970
          %v994 = vmul.f32 %v955, %v970
          %v995 = vmul.f32 %v956, %v970
          %v996 = vmul.f32 %v957, %v970
          %v997 = vmul.f32 %v958, %v970
          %v998 = vmul.f32 %v959, %v970
          %v999 = vmul.f32 %v960, %v970
          %v1000 = vmul.f32 %v961, %v970
          %v1001 = vmul.f32 %v962, %v970
          %v1002 = vmul.f32 %v963, %v970
          %v1003 = vmul.f32 %v964, %v970
          %v1004 = vld [vmem:[#allocation6] sm:$0x1]
          %v1006 = vlaneseq
          %v1007 = vshrl.u32 %v1006, 7
          %v1008 = vsub.s32 0, %v1007
          %v1009 = vrot.slane %v1004, %v1008
          %v1011 = vadd.f32 %v972, %v1009
          %v1012 = vadd.f32 %v973, %v1009
          %v1013 = vadd.f32 %v974, %v1009
          %v1014 = vadd.f32 %v975, %v1009
          %v1015 = vadd.f32 %v976, %v1009
          %v1016 = vadd.f32 %v977, %v1009
          %v1017 = vadd.f32 %v978, %v1009
          %v1018 = vadd.f32 %v979, %v1009
          %v1019 = vadd.f32 %v980, %v1009
          %v1020 = vadd.f32 %v981, %v1009
          %v1021 = vadd.f32 %v982, %v1009
          %v1022 = vadd.f32 %v983, %v1009
          %v1023 = vadd.f32 %v984, %v1009
          %v1024 = vadd.f32 %v985, %v1009
          %v1025 = vadd.f32 %v986, %v1009
          %v1026 = vadd.f32 %v987, %v1009
          %v1027 = vadd.f32 %v988, %v1009
          %v1028 = vadd.f32 %v989, %v1009
          %v1029 = vadd.f32 %v990, %v1009
          %v1030 = vadd.f32 %v991, %v1009
          %v1031 = vadd.f32 %v992, %v1009
          %v1032 = vadd.f32 %v993, %v1009
          %v1033 = vadd.f32 %v994, %v1009
          %v1034 = vadd.f32 %v995, %v1009
          %v1035 = vadd.f32 %v996, %v1009
          %v1036 = vadd.f32 %v997, %v1009
          %v1037 = vadd.f32 %v998, %v1009
          %v1038 = vadd.f32 %v999, %v1009
          %v1039 = vadd.f32 %v1000, %v1009
          %v1040 = vadd.f32 %v1001, %v1009
          %v1041 = vadd.f32 %v1002, %v1009
          %v1042 = vadd.f32 %v1003, %v1009
          %v1043 = vmax.f32 %v1011, 0.0
          %v1044 = vmax.f32 %v1012, 0.0
          %v1045 = vmax.f32 %v1013, 0.0
          %v1046 = vmax.f32 %v1014, 0.0
          %v1047 = vmax.f32 %v1015, 0.0
          %v1048 = vmax.f32 %v1016, 0.0
          %v1049 = vmax.f32 %v1017, 0.0
          %v1050 = vmax.f32 %v1018, 0.0
          %v1051 = vmax.f32 %v1019, 0.0
          %v1052 = vmax.f32 %v1020, 0.0
          %v1053 = vmax.f32 %v1021, 0.0
          %v1054 = vmax.f32 %v1022, 0.0
          %v1055 = vmax.f32 %v1023, 0.0
          %v1056 = vmax.f32 %v1024, 0.0
          %v1057 = vmax.f32 %v1025, 0.0
          %v1058 = vmax.f32 %v1026, 0.0
          %v1059 = vmax.f32 %v1027, 0.0
          %v1060 = vmax.f32 %v1028, 0.0
          %v1061 = vmax.f32 %v1029, 0.0
          %v1062 = vmax.f32 %v1030, 0.0
          %v1063 = vmax.f32 %v1031, 0.0
          %v1064 = vmax.f32 %v1032, 0.0
          %v1065 = vmax.f32 %v1033, 0.0
          %v1066 = vmax.f32 %v1034, 0.0
          %v1067 = vmax.f32 %v1035, 0.0
          %v1068 = vmax.f32 %v1036, 0.0
          %v1069 = vmax.f32 %v1037, 0.0
          %v1070 = vmax.f32 %v1038, 0.0
          %v1071 = vmax.f32 %v1039, 0.0
          %v1072 = vmax.f32 %v1040, 0.0
          %v1073 = vmax.f32 %v1041, 0.0
          %v1074 = vmax.f32 %v1042, 0.0
          %v1075 = vld [vmem:[#allocation7] sm:$0x1]
          %vm1076 = vcmask 261120
          %v1077 = vsel %vm1076, %v1043, 0.0
          %v1078 = vsel %vm1076, %v1044, 0.0
          %v1079 = vadd.f32 %v1077, %v1078
          %v1080 = vsel %vm1076, %v1045, 0.0
          %v1081 = vadd.f32 %v1079, %v1080
          %v1082 = vsel %vm1076, %v1046, 0.0
          %v1083 = vadd.f32 %v1081, %v1082
          %v1084 = vsel %vm1076, %v1047, 0.0
          %v1085 = vadd.f32 %v1083, %v1084
          %v1086 = vsel %vm1076, %v1048, 0.0
          %v1087 = vadd.f32 %v1085, %v1086
          %v1088 = vsel %vm1076, %v1049, 0.0
          %v1089 = vadd.f32 %v1087, %v1088
          %v1090 = vsel %vm1076, %v1050, 0.0
          %v1091 = vadd.f32 %v1089, %v1090
          %v1092 = vsel %vm1076, %v1051, 0.0
          %v1093 = vadd.f32 %v1091, %v1092
          %v1094 = vsel %vm1076, %v1052, 0.0
          %v1095 = vadd.f32 %v1093, %v1094
          %v1096 = vsel %vm1076, %v1053, 0.0
          %v1097 = vadd.f32 %v1095, %v1096
          %v1098 = vsel %vm1076, %v1054, 0.0
          %v1099 = vadd.f32 %v1097, %v1098
          %v1100 = vsel %vm1076, %v1055, 0.0
          %v1101 = vadd.f32 %v1099, %v1100
          %v1102 = vsel %vm1076, %v1056, 0.0
          %v1103 = vadd.f32 %v1101, %v1102
          %v1104 = vsel %vm1076, %v1057, 0.0
          %v1105 = vadd.f32 %v1103, %v1104
          %v1106 = vsel %vm1076, %v1058, 0.0
          %v1107 = vadd.f32 %v1105, %v1106
          %v1108 = vsel %vm1076, %v1059, 0.0
          %v1109 = vadd.f32 %v1107, %v1108
          %v1110 = vsel %vm1076, %v1060, 0.0
          %v1111 = vadd.f32 %v1109, %v1110
          %v1112 = vsel %vm1076, %v1061, 0.0
          %v1113 = vadd.f32 %v1111, %v1112
          %v1114 = vsel %vm1076, %v1062, 0.0
          %v1115 = vadd.f32 %v1113, %v1114
          %v1116 = vsel %vm1076, %v1063, 0.0
          %v1117 = vadd.f32 %v1115, %v1116
          %v1118 = vsel %vm1076, %v1064, 0.0
          %v1119 = vadd.f32 %v1117, %v1118
          %v1120 = vsel %vm1076, %v1065, 0.0
          %v1121 = vadd.f32 %v1119, %v1120
          %v1122 = vsel %vm1076, %v1066, 0.0
          %v1123 = vadd.f32 %v1121, %v1122
          %v1124 = vsel %vm1076, %v1067, 0.0
          %v1125 = vadd.f32 %v1123, %v1124
          %v1126 = vsel %vm1076, %v1068, 0.0
          %v1127 = vadd.f32 %v1125, %v1126
          %v1128 = vsel %vm1076, %v1069, 0.0
          %v1129 = vadd.f32 %v1127, %v1128
          %v1130 = vsel %vm1076, %v1070, 0.0
          %v1131 = vadd.f32 %v1129, %v1130
          %v1132 = vsel %vm1076, %v1071, 0.0
          %v1133 = vadd.f32 %v1131, %v1132
          %v1134 = vsel %vm1076, %v1072, 0.0
          %v1135 = vadd.f32 %v1133, %v1134
          %v1136 = vsel %vm1076, %v1073, 0.0
          %v1137 = vadd.f32 %v1135, %v1136
          %v1138 = vsel %vm1076, %v1074, 0.0
          %v1139 = vadd.f32 %v1137, %v1138
          %v1140 = vrot.slane %v1139, 4
          %v1141 = vadd.f32 %v1139, %v1140
          %v1142 = vrot.slane %v1141, 2
          %v1143 = vadd.f32 %v1141, %v1142
          %v1144 = vrot.slane %v1143, 1
          %v1145 = vadd.f32 %v1143, %v1144
          %v1146 = vadd.f32 %v1075, %v1145
          %vm1147 = vcmask 253952
          %1148 = vst.msk [vmem:[#allocation7] sm:$0x1] %vm1147, %v1146
        $region76: #{cnn_classifier_forward.1} parent=43 // pred_fallthru
          _
        // Predicated region
        $region77: #{cnn_classifier_forward.1} parent=43 // pred_check
          _
        $region78: #{cnn_classifier_forward.1} parent=43 // pred_check_branch
          %1150 = sbr.rel (%p921) target = $region80
        $region79: #{cnn_classifier_forward.1} parent=43 // pred_region
          %v1151 = vld [vmem:[#allocation7] sm:$0x1]
          %v1152 = vmul.f32 %v1151, 0.00390625
          %v1153 = vld [vmem:[%s4] sm:$0xff]
          %v1154 = vld [vmem:[%s4 + $0x8] sm:$0xff]
          %v1155 = vld [vmem:[%s4 + $0x10] sm:$0xff]
          %v1156 = vld [vmem:[%s4 + $0x18] sm:$0xff]
          %v1157 = vld [vmem:[%s5] sm:$0x1]
          %vm1158 = vcmask 261120
          %v1160 = vsel %vm1158, %v1152, 0
          %1162 = vmatprep.subr.mxu0 0.0
          %1163 = vmatpush1.msra.mxu0 %v1153
          %1164 = vmatprep.subr.mxu0 0.0
          %1165 = vmatpush1.msra.mxu0 %v1154
          %1166 = vmatprep.subr.mxu0 0.0
          %1167 = vmatpush1.msra.mxu0 %v1155
          %1168 = vmatprep.subr.mxu0 0.0
          %1169 = vmatpush1.msra.mxu0 %v1156
          %1170 = vmatprep.subr.mxu0 0.0
          %1171 = vmatpush1.msra.mxu0 0.0
          %1172 = vmatprep.subr.mxu0 0.0
          %1173 = vmatpush1.msra.mxu0 0.0
          %1174 = vmatprep.subr.mxu0 0.0
          %1175 = vmatpush1.msra.mxu0 0.0
          %1176 = vmatprep.subr.mxu0 0.0
          %1177 = vmatpush1.msra.mxu0 0.0
          %1178 = vmatprep.subr.mxu0 0.0
          %1179 = vmatpush1.msra.mxu0 0.0
          %1180 = vmatprep.subr.mxu0 0.0
          %1181 = vmatpush1.msra.mxu0 0.0
          %1182 = vmatprep.subr.mxu0 0.0
          %1183 = vmatpush1.msra.mxu0 0.0
          %1184 = vmatprep.subr.mxu0 0.0
          %1185 = vmatpush1.msra.mxu0 0.0
          %1186 = vmatprep.subr.mxu0 0.0
          %1187 = vmatpush1.msra.mxu0 0.0
          %1188 = vmatprep.subr.mxu0 0.0
          %1189 = vmatpush1.msra.mxu0 0.0
          %1190 = vmatprep.subr.mxu0 0.0
          %1191 = vmatpush1.msra.mxu0 0.0
          %1192 = vmatprep.subr.mxu0 0.0
          %1193 = vmatpush1.msra.mxu0 0.0
          %1194 = vmatprep.subr.mxu0 0.0
          %1195 = vmatpush1.msra.mxu0 0.0
          %1196 = vmatprep.subr.mxu0 0.0
          %1197 = vmatpush1.msra.mxu0 0.0
          %1198 = vmatprep.subr.mxu0 0.0
          %1199 = vmatpush1.msra.mxu0 0.0
          %1200 = vmatprep.subr.mxu0 0.0
          %1201 = vmatpush1.msra.mxu0 0.0
          %1202 = vmatprep.subr.mxu0 0.0
          %1203 = vmatpush1.msra.mxu0 0.0
          %1204 = vmatprep.subr.mxu0 0.0
          %1205 = vmatpush1.msra.mxu0 0.0
          %1206 = vmatprep.subr.mxu0 0.0
          %1207 = vmatpush1.msra.mxu0 0.0
          %1208 = vmatprep.subr.mxu0 0.0
          %1209 = vmatpush1.msra.mxu0 0.0
          %1210 = vmatprep.subr.mxu0 0.0
          %1211 = vmatpush1.msra.mxu0 0.0
          %1212 = vmatprep.subr.mxu0 0.0
          %1213 = vmatpush1.msra.mxu0 0.0
          %1214 = vmatprep.subr.mxu0 0.0
          %1215 = vmatpush1.msra.mxu0 0.0
          %1216 = vmatprep.subr.mxu0 0.0
          %1217 = vmatpush1.msra.mxu0 0.0
          %1218 = vmatprep.subr.mxu0 0.0
          %1219 = vmatpush1.msra.mxu0 0.0
          %1220 = vmatprep.subr.mxu0 0.0
          %1221 = vmatpush1.msra.mxu0 0.0
          %1222 = vmatprep.subr.mxu0 0.0
          %1223 = vmatpush1.msra.mxu0 0.0
          %1224 = vmatprep.subr.mxu0 0.0
          %1225 = vmatpush1.msra.mxu0 0.0
          %1226 = vmatprep.mubr.f32.mxu0 0.0
          %1227 = vmatmul.mubr.f32.gmra.mrb[0].mxu0 %v1160
          %v1228 = vpop.f32.mrb[0].mxu0
          %v1229 = vadd.f32 %v1157, %v1228
          %v1230 = vpop.f32.mrb[0].mxu0
          %1231 = vdwg.mxu0
          %vm1232 = vcmask 122880
          %v1233 = vsel %vm1232, %v1229, -inf
          %1234 = vmax.xlane.f32.xlu0 %v1233
          %v1235 = vpop.xlane.xlu0 %1234
          %v1236 = vsub.f32 %v1229, %v1235
          %v1237 = vmul.f32 %v1236, 1.442695
          %v1238 = vpow.pop %v1237
          %v1239 = vsel %vm1232, %v1238, 0.0
          %1240 = vadd.xlane.f32.xlu0 %v1239
          %v1241 = vpop.xlane.xlu0 %1240
          %v1242 = vrcp.pop %v1241
          %v1243 = vmul.f32 %v1238, %v1242
          %s1244 = scalar_lea.vmem [#allocation12], %s27
          %1245 = vst.msk [vmem:[%s1244] sm:$0x1] %vm1232, %v1243
        $region80: #{cnn_classifier_forward.1} parent=43 // pred_fallthru
          _
        // Predicated region
        $region81: #{cnn_classifier_forward.1} parent=43 // pred_check
          %p1246 = pneg %p192
        $region82: #{cnn_classifier_forward.1} parent=43 // pred_check_branch
          %1248 = sbr.rel (%p1246) target = $region84
        $region83: #{cnn_classifier_forward.1} parent=43 // pred_region
          %s1250 = ssub.s32 32, 32
          %1251 = vsyncadd [#allocation11], %s1250
          %s1252 = sshll.u32 [#allocation12], 4
          %s1253 = int_to_ptr.vmem [resolvable:$true] %s1252
          %1258 = dma.vmem_to_hbm [thread:$0]  %s1253, 32, %s6, [#allocation11], 16, 16, 1
        $region84: #{cnn_classifier_forward.1} parent=43 // pred_fallthru
          _
        // Predicated region
        $region85: #{cnn_classifier_forward.1} parent=43 // pred_check
          %p1259 = pneg %p192
        $region86: #{cnn_classifier_forward.1} parent=43 // pred_check_branch
          %1261 = sbr.rel (%p1259) target = $region88
        $region87: #{cnn_classifier_forward.1} parent=43 // pred_region
          %1262 = dma.done [#allocation11], 32
        $region88: #{cnn_classifier_forward.1} parent=43 // pred_fallthru
          _
      $region44: #{cnn_classifier_forward.1} parent=5 // pred_fallthru
        _
      %p1263 = scmp.le.s32.totalorder 2, %s16
      // Predicated region
      $region89: #{cnn_classifier_forward.1} parent=5 // pred_check
        %p1264 = pneg %p1263
      $region90: #{cnn_classifier_forward.1} parent=5 // pred_check_branch
        %1266 = sbr.rel (%p1264) target = $region92
      $region91: #{cnn_classifier_forward.1} parent=5 // pred_region
        %s1267 = ssub.s32 %s16, 2
      $region92: #{cnn_classifier_forward.1} parent=5 // pred_fallthru
        _
    $region6: #{cnn_classifier_forward.1} parent=1 // loop_footer
      %s20 = sadd.s32 1, %s16
    $region7: #{cnn_classifier_forward.1} parent=1 // loop_footer_branch
      %15 = sbr.rel target = $region3
    $region8: #{cnn_classifier_forward.1} parent=1 // loop_exit
      _
    %1268 = vsyncpa [#allocation10], 1
    %s1269 = scalar_lea.sflag [#allocation10], 1
    %1270 = vsyncpa %s1269, 1
    %1271 = vsyncpa [#allocation11], 1
    %s1272 = scalar_lea.sflag [#allocation11], 1
    %1273 = vsyncpa %s1272, 1

</llo_original>
